<compile_context>
chip_gen: v7x
topology: tpu7x:2x2x1
jax: 0.10.0
libtpu: 0.0.40
codegen_flags: <defaults>
</compile_context>

<pallas_src>
import jax
import jax.numpy as jnp
from jax.experimental import pallas as pl
from jax.experimental.pallas import tpu as pltpu

N_CLASSES = 4
HALF = 128          # each fused [main | shortcut] half is padded to 128 lanes
OUT_PAD = 128       # lane-dense padded output width of the final layer
NEG_BIG = -1e30     # padded-logit bias -> exp() == 0 exactly


def _round_up(n, m):
    return ((n + m - 1) // m) * m


def _net_kernel(
    x_ref,
    w1_ref, b1_ref,      # fused block 1:          (F, 256)   / (1, 256)
    w2_ref, b2_ref,      # block 2 (identity):     (128, 128) / (1, 128)
    w3_ref, b3_ref,      # fused block 3 (padded): (128, 256) / (1, 256)
    w4_ref, b4_ref,      # fused block 4 (padded): (128, 256) / (1, 256)
    wf_ref, bf_ref,      # final layer (padded):   (128, 128) / (1, 128)
    o_ref,
):
    x = x_ref[...]                                        # f32 (tb, F)

    def mm(h, w_ref, b_ref):
        # bf16 operands into the MXU, f32 accumulate, f32 bias add.
        return (
            jnp.dot(h.astype(w_ref.dtype), w_ref[...],
                    preferred_element_type=jnp.float32)
            + b_ref[...]
        )

    def fused_block(h, w_ref, b_ref):
        # One MXU pass for [main | shortcut]; the split lands on a 128-lane
        # vreg boundary, then relu the main half and add the shortcut half.
        y = mm(h, w_ref, b_ref)                           # (tb, 256)
        return jnp.maximum(y[:, :HALF], 0.0) + y[:, HALF:]

    h = fused_block(x, w1_ref, b1_ref)                    # block 1 (linear shortcut)
    h = jnp.maximum(mm(h, w2_ref, b2_ref), 0.0) + h       # block 2 (identity shortcut)
    h = fused_block(h, w3_ref, b3_ref)                    # block 3 (padded to 128 lanes)
    h = fused_block(h, w4_ref, b4_ref)                    # block 4 (padded to 128 lanes)
    logits = mm(h, wf_ref, bf_ref)                        # (tb, 128); pad lanes = -1e30

    # softmax over dim=1; padded lanes contribute exp(-huge) == 0.
    m = jnp.max(logits, axis=-1, keepdims=True)
    e = jnp.exp(logits - m)
    s = jnp.sum(e, axis=-1, keepdims=True)
    o_ref[...] = (e * pl.reciprocal(s, approx=True)).astype(o_ref.dtype)


def pack_params(p, weight_dtype=jnp.bfloat16):
    """Fuse main+shortcut weights into [main | shortcut] matrices whose halves
    are zero-padded to 128 output lanes (vreg-aligned splits; free width on the
    256-wide v6e/v7x MXU). Downstream K dims are zero-padded to 128 rows.
    Biases are (1, N) f32. The final layer is padded to 128 output lanes with
    NEG_BIG bias on the padded lanes so the in-kernel 128-lane softmax is exact."""

    def padw(w, rows, cols):
        return jnp.pad(w.astype(jnp.float32),
                       ((0, rows - w.shape[0]), (0, cols - w.shape[1])))

    def fuse_w(a, b, rows):
        return jnp.concatenate(
            [padw(a, rows, HALF), padw(b, rows, HALF)], axis=1
        ).astype(weight_dtype)

    def fuse_b(a, b):
        pa = jnp.pad(a.astype(jnp.float32), (0, HALF - a.shape[0]))
        pb = jnp.pad(b.astype(jnp.float32), (0, HALF - b.shape[0]))
        return jnp.concatenate([pa, pb])[None, :]

    feat = p["w1"].shape[0]

    wf = padw(p["wf"], HALF, OUT_PAD).astype(weight_dtype)
    bf = jnp.full((1, OUT_PAD), NEG_BIG, jnp.float32)
    bf = bf.at[0, :N_CLASSES].set(p["bf"].astype(jnp.float32))

    return dict(
        w1=fuse_w(p["w1"], p["ws1"], feat), b1=fuse_b(p["b1"], p["bs1"]),
        w2=p["w2"].astype(weight_dtype),    b2=p["b2"][None, :].astype(jnp.float32),
        w3=fuse_w(p["w3"], p["ws3"], HALF), b3=fuse_b(p["b3"], p["bs3"]),
        w4=fuse_w(p["w4"], p["ws4"], HALF), b4=fuse_b(p["b4"], p["bs4"]),
        wf=wf, bf=bf,
    )


def _choose_tb(padded8, block_batch):
    """Pick the batch tile: a multiple-of-8 divisor of the (8-aligned) batch,
    as large as possible up to block_batch, preferring >= 2 grid steps so the
    'parallel' batch axis can shard across both v7x TensorCores."""
    divs = [d for d in range(8, padded8 + 1, 8) if padded8 % d == 0]
    two_step = [d for d in divs if d <= block_batch and padded8 // d >= 2]
    if two_step:
        return max(two_step)
    fits = [d for d in divs if d <= block_batch]
    return max(fits) if fits else padded8


def net_forward(x, packed, *, block_batch=512):
    """x: [batch, in_features] f32. packed: output of pack_params().
    Returns [batch, 4] f32 softmax probabilities."""
    batch, feat = x.shape

    # Pad only up to the next multiple of 8 sublanes (cheap); tb is then a
    # divisor of that, so no tb-sized wrapper-side jnp.pad / extra HBM pass.
    padded = _round_up(batch, 8)
    if padded != batch:
        x = jnp.pad(x, ((0, padded - batch), (0, 0)))
    tb = _choose_tb(padded, block_batch)

    names = ("w1", "b1", "w2", "b2", "w3", "b3", "w4", "b4", "wf", "bf")
    weights = [packed[n] for n in names]

    in_specs = [pl.BlockSpec((tb, feat), lambda i: (i, 0))]          # streamed x tile
    # Weights: full-array blocks, same block every grid step -> VMEM-resident.
    in_specs += [pl.BlockSpec(w.shape, lambda i: (0, 0)) for w in weights]

    out = pl.pallas_call(
        _net_kernel,
        out_shape=jax.ShapeDtypeStruct((padded, OUT_PAD), jnp.bfloat16),
        grid=(padded // tb,),
        in_specs=in_specs,
        out_specs=pl.BlockSpec((tb, OUT_PAD), lambda i: (i, 0)),
        compiler_params=pltpu.CompilerParams(
            dimension_semantics=("parallel",)),
    )(x, *weights)

    return out[:batch, :N_CLASSES].astype(jnp.float32)


def init_params(key, in_features):
    """Deterministic synthetic parameter init (matches module shapes), [in, out] layout."""
    dims = dict(
        w1=(in_features, 128), b1=(128,), ws1=(in_features, 128), bs1=(128,),
        w2=(128, 128), b2=(128,),
        w3=(128, 64), b3=(64,), ws3=(128, 64), bs3=(64,),
        w4=(64, 32), b4=(32,), ws4=(64, 32), bs4=(32,),
        wf=(32, 4), bf=(4,),
    )
    params = {}
    keys = jax.random.split(key, len(dims))
    for k, (name, shape) in zip(keys, sorted(dims.items())):
        scale = 1.0 / jnp.sqrt(jnp.float32(shape[0]))
        params[name] = jax.random.uniform(k, shape, jnp.float32, -1.0, 1.0) * scale
    return params


def net_forward_ref(x, p):
    """Plain-JAX f32 reference of the original module (eval mode)."""
    def lin(h, w, b):
        return h @ w + b
    h = jnp.maximum(lin(x, p["w1"], p["b1"]), 0.0) + lin(x, p["ws1"], p["bs1"])
    h = jnp.maximum(lin(h, p["w2"], p["b2"]), 0.0) + h
    h = jnp.maximum(lin(h, p["w3"], p["b3"]), 0.0) + lin(h, p["ws3"], p["bs3"])
    h = jnp.maximum(lin(h, p["w4"], p["b4"]), 0.0) + lin(h, p["ws4"], p["bs4"])
    return jax.nn.softmax(lin(h, p["wf"], p["bf"]), axis=1)


def net_forward_ref_packed(x, packed):
    """Plain-JAX reference emulating the kernel numerics
    (bf16 MXU operands, f32 accumulation, bf16 output store)."""
    def mm(h, w, b):
        return jnp.dot(h.astype(jnp.bfloat16).astype(jnp.float32),
                       w.astype(jnp.float32),
                       preferred_element_type=jnp.float32) + b

    def fused(h, w, b):
        y = mm(h, w, b)
        return jnp.maximum(y[:, :HALF], 0.0) + y[:, HALF:]

    h = fused(x, packed["w1"], packed["b1"])
    h = jnp.maximum(mm(h, packed["w2"], packed["b2"]), 0.0) + h
    h = fused(h, packed["w3"], packed["b3"])
    h = fused(h, packed["w4"], packed["b4"])
    logits = mm(h, packed["wf"], packed["bf"])
    probs = jax.nn.softmax(logits, axis=-1)
    return probs.astype(jnp.bfloat16).astype(jnp.float32)[:, :N_CLASSES]


if __name__ == "__main__":
    key = jax.random.PRNGKey(0)
    kx, kp = jax.random.split(key)

    batch, in_features = 256, 16   # in_features stands in for train_features.shape[1]
    x = jax.random.normal(kx, (batch, in_features), dtype=jnp.float32)
    params = init_params(kp, in_features)
    packed = pack_params(params)

    # batch=256 -> tb=128, grid=(2,): two parallel grid steps (both v7x TCs busy).
    out = net_forward(x, packed, block_batch=512)
    out = jax.block_until_ready(out)

    ref_kernel_numerics = net_forward_ref_packed(x, packed)   # same bf16 weights/store
    ref_f32 = net_forward_ref(x, params)                      # original f32 semantics

    assert out.shape == (batch, N_CLASSES)
    assert bool(jnp.all(jnp.isfinite(out)))
    assert jnp.allclose(jnp.sum(out, axis=1), 1.0, atol=2e-2)
    assert jnp.allclose(out, ref_kernel_numerics, atol=1e-2, rtol=1e-2)
    assert jnp.allclose(out, ref_f32, atol=5e-2, rtol=5e-2)

    print("KERNEL_OK")
</pallas_src>

<mosaic_0001>
module attributes {stable_mosaic.version = 11 : i64} {
  func.func @_net_kernel(%arg0: i32, %arg1: memref<128x16xf32, #tpu.memory_space<vmem>>, %arg2: memref<16x256xbf16, #tpu.memory_space<vmem>>, %arg3: memref<1x256xf32, #tpu.memory_space<vmem>>, %arg4: memref<128x128xbf16, #tpu.memory_space<vmem>>, %arg5: memref<1x128xf32, #tpu.memory_space<vmem>>, %arg6: memref<128x256xbf16, #tpu.memory_space<vmem>>, %arg7: memref<1x256xf32, #tpu.memory_space<vmem>>, %arg8: memref<128x256xbf16, #tpu.memory_space<vmem>>, %arg9: memref<1x256xf32, #tpu.memory_space<vmem>>, %arg10: memref<128x128xbf16, #tpu.memory_space<vmem>>, %arg11: memref<1x128xf32, #tpu.memory_space<vmem>>, %arg12: memref<128x128xbf16, #tpu.memory_space<vmem>>) attributes {dimension_semantics = [#tpu.dimension_semantics<parallel>], iteration_bounds = array<i64: 2>, scalar_prefetch = 0 : i64, scratch_operands = 0 : i64, tpu.core_type = #tpu.core_type<tc>, window_params = [{transform_indices = @transform_0, window_bounds = array<i64: 128, 16>}, {pipeline_mode = #tpu.pipeline_mode<synchronous>, transform_indices = @transform_1, window_bounds = array<i64: 16, 256>}, {pipeline_mode = #tpu.pipeline_mode<synchronous>, transform_indices = @transform_2, window_bounds = array<i64: 1, 256>}, {pipeline_mode = #tpu.pipeline_mode<synchronous>, transform_indices = @transform_3, window_bounds = array<i64: 128, 128>}, {pipeline_mode = #tpu.pipeline_mode<synchronous>, transform_indices = @transform_4, window_bounds = array<i64: 1, 128>}, {pipeline_mode = #tpu.pipeline_mode<synchronous>, transform_indices = @transform_5, window_bounds = array<i64: 128, 256>}, {pipeline_mode = #tpu.pipeline_mode<synchronous>, transform_indices = @transform_6, window_bounds = array<i64: 1, 256>}, {pipeline_mode = #tpu.pipeline_mode<synchronous>, transform_indices = @transform_7, window_bounds = array<i64: 128, 256>}, {pipeline_mode = #tpu.pipeline_mode<synchronous>, transform_indices = @transform_8, window_bounds = array<i64: 1, 256>}, {pipeline_mode = #tpu.pipeline_mode<synchronous>, transform_indices = @transform_9, window_bounds = array<i64: 128, 128>}, {pipeline_mode = #tpu.pipeline_mode<synchronous>, transform_indices = @transform_10, window_bounds = array<i64: 1, 128>}, {transform_indices = @transform_11, window_bounds = array<i64: 128, 128>}]} {
    %c0 = arith.constant 0 : index
    %c0_0 = arith.constant 0 : index
    %0 = vector.load %arg1[%c0, %c0_0] : memref<128x16xf32, #tpu.memory_space<vmem>>, vector<128x16xf32>
    %1 = arith.truncf %0 : vector<128x16xf32> to vector<128x16xbf16>
    %c0_1 = arith.constant 0 : index
    %c0_2 = arith.constant 0 : index
    %2 = vector.load %arg2[%c0_1, %c0_2] : memref<16x256xbf16, #tpu.memory_space<vmem>>, vector<16x256xbf16>
    %cst = arith.constant dense<0.000000e+00> : vector<128x256xf32>
    %3 = tpu.matmul %1, %2, %cst {dimension_numbers = #tpu.dot_dimension_numbers<[1], [0], [0], [1], [0, 0, 1, 1], [], []>} : vector<128x16xbf16>, vector<16x256xbf16>, vector<128x256xf32> -> vector<128x256xf32>
    %c0_3 = arith.constant 0 : index
    %c0_4 = arith.constant 0 : index
    %4 = vector.load %arg3[%c0_3, %c0_4] : memref<1x256xf32, #tpu.memory_space<vmem>>, vector<1x256xf32>
    %5 = vector.broadcast %4 : vector<1x256xf32> to vector<128x256xf32>
    %6 = arith.addf %3, %5 : vector<128x256xf32>
    %7 = vector.extract_strided_slice %6 {offsets = [0, 0], sizes = [128, 128], strides = [1, 1]} : vector<128x256xf32> to vector<128x128xf32>
    %cst_5 = arith.constant 0.000000e+00 : f32
    %8 = vector.broadcast %cst_5 : f32 to vector<128x128xf32>
    %9 = arith.maximumf %7, %8 : vector<128x128xf32>
    %10 = vector.extract_strided_slice %6 {offsets = [0, 128], sizes = [128, 128], strides = [1, 1]} : vector<128x256xf32> to vector<128x128xf32>
    %11 = arith.addf %9, %10 : vector<128x128xf32>
    %12 = arith.truncf %11 : vector<128x128xf32> to vector<128x128xbf16>
    %c0_6 = arith.constant 0 : index
    %c0_7 = arith.constant 0 : index
    %13 = vector.load %arg4[%c0_6, %c0_7] : memref<128x128xbf16, #tpu.memory_space<vmem>>, vector<128x128xbf16>
    %cst_8 = arith.constant dense<0.000000e+00> : vector<128x128xf32>
    %14 = tpu.matmul %12, %13, %cst_8 {dimension_numbers = #tpu.dot_dimension_numbers<[1], [0], [0], [1], [0, 0, 1, 1], [], []>} : vector<128x128xbf16>, vector<128x128xbf16>, vector<128x128xf32> -> vector<128x128xf32>
    %c0_9 = arith.constant 0 : index
    %c0_10 = arith.constant 0 : index
    %15 = vector.load %arg5[%c0_9, %c0_10] : memref<1x128xf32, #tpu.memory_space<vmem>>, vector<1x128xf32>
    %16 = vector.broadcast %15 : vector<1x128xf32> to vector<128x128xf32>
    %17 = arith.addf %14, %16 : vector<128x128xf32>
    %cst_11 = arith.constant 0.000000e+00 : f32
    %18 = vector.broadcast %cst_11 : f32 to vector<128x128xf32>
    %19 = arith.maximumf %17, %18 : vector<128x128xf32>
    %20 = arith.addf %19, %11 : vector<128x128xf32>
    %21 = arith.truncf %20 : vector<128x128xf32> to vector<128x128xbf16>
    %c0_12 = arith.constant 0 : index
    %c0_13 = arith.constant 0 : index
    %22 = vector.load %arg6[%c0_12, %c0_13] : memref<128x256xbf16, #tpu.memory_space<vmem>>, vector<128x256xbf16>
    %cst_14 = arith.constant dense<0.000000e+00> : vector<128x256xf32>
    %23 = tpu.matmul %21, %22, %cst_14 {dimension_numbers = #tpu.dot_dimension_numbers<[1], [0], [0], [1], [0, 0, 1, 1], [], []>} : vector<128x128xbf16>, vector<128x256xbf16>, vector<128x256xf32> -> vector<128x256xf32>
    %c0_15 = arith.constant 0 : index
    %c0_16 = arith.constant 0 : index
    %24 = vector.load %arg7[%c0_15, %c0_16] : memref<1x256xf32, #tpu.memory_space<vmem>>, vector<1x256xf32>
    %25 = vector.broadcast %24 : vector<1x256xf32> to vector<128x256xf32>
    %26 = arith.addf %23, %25 : vector<128x256xf32>
    %27 = vector.extract_strided_slice %26 {offsets = [0, 0], sizes = [128, 128], strides = [1, 1]} : vector<128x256xf32> to vector<128x128xf32>
    %cst_17 = arith.constant 0.000000e+00 : f32
    %28 = vector.broadcast %cst_17 : f32 to vector<128x128xf32>
    %29 = arith.maximumf %27, %28 : vector<128x128xf32>
    %30 = vector.extract_strided_slice %26 {offsets = [0, 128], sizes = [128, 128], strides = [1, 1]} : vector<128x256xf32> to vector<128x128xf32>
    %31 = arith.addf %29, %30 : vector<128x128xf32>
    %32 = arith.truncf %31 : vector<128x128xf32> to vector<128x128xbf16>
    %c0_18 = arith.constant 0 : index
    %c0_19 = arith.constant 0 : index
    %33 = vector.load %arg8[%c0_18, %c0_19] : memref<128x256xbf16, #tpu.memory_space<vmem>>, vector<128x256xbf16>
    %cst_20 = arith.constant dense<0.000000e+00> : vector<128x256xf32>
    %34 = tpu.matmul %32, %33, %cst_20 {dimension_numbers = #tpu.dot_dimension_numbers<[1], [0], [0], [1], [0, 0, 1, 1], [], []>} : vector<128x128xbf16>, vector<128x256xbf16>, vector<128x256xf32> -> vector<128x256xf32>
    %c0_21 = arith.constant 0 : index
    %c0_22 = arith.constant 0 : index
    %35 = vector.load %arg9[%c0_21, %c0_22] : memref<1x256xf32, #tpu.memory_space<vmem>>, vector<1x256xf32>
    %36 = vector.broadcast %35 : vector<1x256xf32> to vector<128x256xf32>
    %37 = arith.addf %34, %36 : vector<128x256xf32>
    %38 = vector.extract_strided_slice %37 {offsets = [0, 0], sizes = [128, 128], strides = [1, 1]} : vector<128x256xf32> to vector<128x128xf32>
    %cst_23 = arith.constant 0.000000e+00 : f32
    %39 = vector.broadcast %cst_23 : f32 to vector<128x128xf32>
    %40 = arith.maximumf %38, %39 : vector<128x128xf32>
    %41 = vector.extract_strided_slice %37 {offsets = [0, 128], sizes = [128, 128], strides = [1, 1]} : vector<128x256xf32> to vector<128x128xf32>
    %42 = arith.addf %40, %41 : vector<128x128xf32>
    %43 = arith.truncf %42 : vector<128x128xf32> to vector<128x128xbf16>
    %c0_24 = arith.constant 0 : index
    %c0_25 = arith.constant 0 : index
    %44 = vector.load %arg10[%c0_24, %c0_25] : memref<128x128xbf16, #tpu.memory_space<vmem>>, vector<128x128xbf16>
    %cst_26 = arith.constant dense<0.000000e+00> : vector<128x128xf32>
    %45 = tpu.matmul %43, %44, %cst_26 {dimension_numbers = #tpu.dot_dimension_numbers<[1], [0], [0], [1], [0, 0, 1, 1], [], []>} : vector<128x128xbf16>, vector<128x128xbf16>, vector<128x128xf32> -> vector<128x128xf32>
    %c0_27 = arith.constant 0 : index
    %c0_28 = arith.constant 0 : index
    %46 = vector.load %arg11[%c0_27, %c0_28] : memref<1x128xf32, #tpu.memory_space<vmem>>, vector<1x128xf32>
    %47 = vector.broadcast %46 : vector<1x128xf32> to vector<128x128xf32>
    %48 = arith.addf %45, %47 : vector<128x128xf32>
    %cst_29 = arith.constant dense<0xFF800000> : vector<128xf32>
    %49 = vector.multi_reduction <maximumf>, %48, %cst_29 [1] : vector<128x128xf32> to vector<128xf32>
    %50 = vector.shape_cast %49 : vector<128xf32> to vector<128x1xf32>
    %51 = vector.broadcast %50 : vector<128x1xf32> to vector<128x128xf32>
    %52 = arith.subf %48, %51 : vector<128x128xf32>
    %53 = math.exp %52 : vector<128x128xf32>
    %cst_30 = arith.constant dense<0.000000e+00> : vector<128xf32>
    %54 = vector.multi_reduction <add>, %53, %cst_30 [1] : vector<128x128xf32> to vector<128xf32>
    %55 = vector.shape_cast %54 : vector<128xf32> to vector<128x1xf32>
    %56 = tpu.reciprocal %55 {approx = true} : vector<128x1xf32> -> vector<128x1xf32>
    %57 = vector.broadcast %56 : vector<128x1xf32> to vector<128x128xf32>
    %58 = arith.mulf %53, %57 : vector<128x128xf32>
    %59 = arith.truncf %58 : vector<128x128xf32> to vector<128x128xbf16>
    %c0_31 = arith.constant 0 : index
    %c0_32 = arith.constant 0 : index
    %60 = vector.load %arg12[%c0_31, %c0_32] : memref<128x128xbf16, #tpu.memory_space<vmem>>, vector<128x128xbf16>
    tpu.vector_store %arg12[%c0_31, %c0_32], %59 {strides = array<i32>} : memref<128x128xbf16, #tpu.memory_space<vmem>>, vector<128x128xbf16>,
    return
  }
  func.func @transform_0(%arg0: i32) -> (i32, i32) {
    %c0_i32 = arith.constant 0 : i32
    %c0_i32_0 = arith.constant 0 : i32
    return %arg0, %c0_i32 : i32, i32
  }
  func.func @transform_1(%arg0: i32) -> (i32, i32) {
    %c0_i32 = arith.constant 0 : i32
    %c0_i32_0 = arith.constant 0 : i32
    %c0_i32_1 = arith.constant 0 : i32
    return %c0_i32, %c0_i32_0 : i32, i32
  }
  func.func @transform_2(%arg0: i32) -> (i32, i32) {
    %c0_i32 = arith.constant 0 : i32
    %c0_i32_0 = arith.constant 0 : i32
    %c0_i32_1 = arith.constant 0 : i32
    return %c0_i32, %c0_i32_0 : i32, i32
  }
  func.func @transform_3(%arg0: i32) -> (i32, i32) {
    %c0_i32 = arith.constant 0 : i32
    %c0_i32_0 = arith.constant 0 : i32
    %c0_i32_1 = arith.constant 0 : i32
    return %c0_i32, %c0_i32_0 : i32, i32
  }
  func.func @transform_4(%arg0: i32) -> (i32, i32) {
    %c0_i32 = arith.constant 0 : i32
    %c0_i32_0 = arith.constant 0 : i32
    %c0_i32_1 = arith.constant 0 : i32
    return %c0_i32, %c0_i32_0 : i32, i32
  }
  func.func @transform_5(%arg0: i32) -> (i32, i32) {
    %c0_i32 = arith.constant 0 : i32
    %c0_i32_0 = arith.constant 0 : i32
    %c0_i32_1 = arith.constant 0 : i32
    return %c0_i32, %c0_i32_0 : i32, i32
  }
  func.func @transform_6(%arg0: i32) -> (i32, i32) {
    %c0_i32 = arith.constant 0 : i32
    %c0_i32_0 = arith.constant 0 : i32
    %c0_i32_1 = arith.constant 0 : i32
    return %c0_i32, %c0_i32_0 : i32, i32
  }
  func.func @transform_7(%arg0: i32) -> (i32, i32) {
    %c0_i32 = arith.constant 0 : i32
    %c0_i32_0 = arith.constant 0 : i32
    %c0_i32_1 = arith.constant 0 : i32
    return %c0_i32, %c0_i32_0 : i32, i32
  }
  func.func @transform_8(%arg0: i32) -> (i32, i32) {
    %c0_i32 = arith.constant 0 : i32
    %c0_i32_0 = arith.constant 0 : i32
    %c0_i32_1 = arith.constant 0 : i32
    return %c0_i32, %c0_i32_0 : i32, i32
  }
  func.func @transform_9(%arg0: i32) -> (i32, i32) {
    %c0_i32 = arith.constant 0 : i32
    %c0_i32_0 = arith.constant 0 : i32
    %c0_i32_1 = arith.constant 0 : i32
    return %c0_i32, %c0_i32_0 : i32, i32
  }
  func.func @transform_10(%arg0: i32) -> (i32, i32) {
    %c0_i32 = arith.constant 0 : i32
    %c0_i32_0 = arith.constant 0 : i32
    %c0_i32_1 = arith.constant 0 : i32
    return %c0_i32, %c0_i32_0 : i32, i32
  }
  func.func @transform_11(%arg0: i32) -> (i32, i32) {
    %c0_i32 = arith.constant 0 : i32
    %c0_i32_0 = arith.constant 0 : i32
    return %arg0, %c0_i32 : i32, i32
  }
}

</mosaic_0001>

<llo_original>
// kernel: tpu_custom_call.1
$region0: #{tpu_custom_call.1}
  #allocation0 [shape = 'u32[]', space=smem, size = 0x4, offset = 0x4, fixed_abs, tag = 'smem constant byte address 0x4 - core index']
  #allocation1 [shape = 'u32[144,128]{1,0:T(1,128)}', space=vmem, size = 0x12000, scoped, tag = 'internal scratch']
  %s0 = inlined_call_operand.vmem [shape: f32[256,16], index: 0, kind: input, shape index: {}]
  %s1 = inlined_call_operand.hbm [shape: bf16[16,256], index: 1, kind: input, shape index: {}]
  %s2 = inlined_call_operand.vmem [shape: f32[1,256], index: 2, kind: input, shape index: {}]
  %s3 = inlined_call_operand.hbm [shape: bf16[128,128], index: 3, kind: input, shape index: {}]
  %s4 = inlined_call_operand.hbm [shape: f32[1,128], index: 4, kind: input, shape index: {}]
  %s5 = inlined_call_operand.vmem [shape: bf16[128,256], index: 5, kind: input, shape index: {}]
  %s6 = inlined_call_operand.hbm [shape: f32[1,256], index: 6, kind: input, shape index: {}]
  %s7 = inlined_call_operand.vmem [shape: bf16[128,256], index: 7, kind: input, shape index: {}]
  %s8 = inlined_call_operand.hbm [shape: f32[1,256], index: 8, kind: input, shape index: {}]
  %s9 = inlined_call_operand.vmem [shape: bf16[128,128], index: 9, kind: input, shape index: {}]
  %s10 = inlined_call_operand.vmem [shape: f32[1,128], index: 10, kind: input, shape index: {}]
  %s11 = inlined_call_operand.hbm [shape: bf16[256,128], index: 11, kind: output, shape index: {}]
  %s12 = sld [smem:[#allocation0]]
  $region97: #{tpu_custom_call.1} parent=0
    _
  %s14 = ssub.s32 1, %s12
  %s15 = scalar_select 0, %s14, %s12
  $region1: #{tpu_custom_call.1} parent=0
    #allocation2 [shape = 'u8[8192]{0}', space=vmem, size = 0x2000, scoped, tag = 'input window, operand 1, single buffered']
    #allocation3 [shape = 's32[2]{0}', space=sflag, size = 0x8, scoped, tag = 'scoped memory for tpu_custom_call.1']
    #allocation4 [shape = 's32[2]{0}', space=sflag, size = 0x8, scoped, tag = 'scoped memory for tpu_custom_call.1']
    #allocation5 [shape = 'u8[32768]{0}', space=vmem, size = 0x8000, scoped, tag = 'input window, operand 3, single buffered']
    #allocation6 [shape = 's32[1]{0}', space=sflag, size = 0x4, scoped, tag = 'scoped memory for tpu_custom_call.1']
    #allocation7 [shape = 'u8[512]{0}', space=vmem, size = 0x400, scoped, tag = 'input window, operand 4, single buffered']
    #allocation8 [shape = 'u8[1024]{0}', space=vmem, size = 0x400, scoped, tag = 'input window, operand 6, single buffered']
    #allocation9 [shape = 's32[1]{0}', space=sflag, size = 0x4, scoped, tag = 'scoped memory for tpu_custom_call.1']
    #allocation10 [shape = 'u8[1024]{0}', space=vmem, size = 0x400, scoped, tag = 'input window, operand 8, single buffered']
    #allocation11 [shape = 'u8[65536]{0}', space=vmem, size = 0x10000, scoped, tag = 'output window, operand 0']
    %16 = vsyncpa [#allocation3], 0
    %17 = vsyncpa [#allocation6], 0
    %18 = vsyncpa [#allocation9], 0
    %19 = vsyncpa [#allocation4], 0
    %s20 = scalar_lea.sflag [#allocation4], 1
    %21 = vsyncpa %s20, 0
    loop: start=0, step=1, limit=4
    $region2: #{tpu_custom_call.1} parent=1 // loop_pre_header
      _
    $region3: #{tpu_custom_call.1} parent=1 // loop_header
      %s23 = sphi 0, %s27
      %p24 = scmp.ge.s32.totalorder %s23, 4
      %s33 = sphi 0, %s35
      %s36 = sphi 0, %s33
      %s37 = sphi 0, %s36
      %s53 = sphi 0, %s37
      %s57 = sphi 0, %s57
      %s59 = sphi 0, %s57
      %s60 = sphi 0, %s59
      %s74 = sphi 0, %s60
      %s78 = sphi 0, %s78
      %s80 = sphi 0, %s78
      %s81 = sphi 0, %s80
      %s95 = sphi 0, %s81
      %s99 = sphi 0, %s99
      %s101 = sphi 0, %s99
      %s102 = sphi 0, %s101
      %s116 = sphi 0, %s102
      %s120 = sphi 0, %s120
      %s122 = sphi 0, %s120
      %s123 = sphi 0, %s122
      %s137 = sphi 0, %s123
      %s141 = sphi 0, %s141
      %s143 = sphi 0, %s141
      %s144 = sphi 0, %s143
      %s158 = sphi 0, %s144
      %s162 = sphi 0, %s162
      %s164 = sphi 0, %s162
      %s165 = sphi 0, %s164
      %s179 = sphi 0, %s165
      %s183 = sphi 0, %s183
      %s185 = sphi 0, %s183
      %s186 = sphi 0, %s185
      %s200 = sphi 0, %s186
      %s204 = sphi 0, %s204
      %s206 = sphi 0, %s204
      %s207 = sphi 0, %s206
      %s221 = sphi 0, %s207
      %s225 = sphi 0, %s225
      %s227 = sphi 0, %s225
      %s228 = sphi 0, %s227
      %s242 = sphi 0, %s228
      %s246 = sphi 0, %s246
      %s248 = sphi 0, %s246
      %s249 = sphi 0, %s248
      %s263 = sphi 0, %s249
      %s269 = sphi 0, %s271
      %s272 = sphi 0, %s269
      %s273 = sphi 0, %s272
      %s289 = sphi 0, %s273
    $region4: #{tpu_custom_call.1} parent=1 // loop_header_branch
      %26 = sbr.rel (%p24) target = $region8
    $region5: #{tpu_custom_call.1} parent=1 // loop_body
      %s28 = ssub.s32 %s23, 1
      %s29 = ssub.s32 %s23, 2
      %s30 = sadd.s32 %s23, 1
      %s31 = ssub.s32 %s23, %s30
      %p32 = scmp.eq.s32.totalorder %s31, 0
      %s34 = sadd.s32 %s33, 1
      %s35 = scalar_select %p32, %s33, %s34
      %p38 = pneg %p32
      %p39 = scmp.eq.s32.totalorder %s23, 1
      %p40 = por %p38, %p39
      %p41 = scmp.ne.s32.totalorder %s33, %s36
      %p42 = scmp.eq.s32.totalorder %s23, 0
      %p43 = por %p41, %p42
      %p44 = scmp.ne.s32.totalorder %s33, %s36
      %p45 = scmp.eq.s32.totalorder %s28, 1
      %p46 = por %p44, %p45
      %p47 = scmp.ne.s32.totalorder %s36, %s37
      %p48 = scmp.eq.s32.totalorder %s28, 0
      %p49 = por %p47, %p48
      %p50 = scmp.ne.s32.totalorder %s36, %s37
      %p51 = scmp.eq.s32.totalorder %s29, 1
      %p52 = por %p50, %p51
      %p54 = scmp.ne.s32.totalorder %s37, %s53
      %p55 = scmp.eq.s32.totalorder %s29, 0
      %p56 = por %p54, %p55
      %s58 = sadd.s32 %s57, 1
      %p61 = scmp.eq.s32.totalorder %s23, 1
      %p62 = scmp.ne.s32.totalorder %s57, %s59
      %p63 = scmp.eq.s32.totalorder %s23, 0
      %p64 = por %p62, %p63
      %p65 = scmp.ne.s32.totalorder %s57, %s59
      %p66 = scmp.eq.s32.totalorder %s28, 1
      %p67 = por %p65, %p66
      %p68 = scmp.ne.s32.totalorder %s59, %s60
      %p69 = scmp.eq.s32.totalorder %s28, 0
      %p70 = por %p68, %p69
      %p71 = scmp.ne.s32.totalorder %s59, %s60
      %p72 = scmp.eq.s32.totalorder %s29, 1
      %p73 = por %p71, %p72
      %p75 = scmp.ne.s32.totalorder %s60, %s74
      %p76 = scmp.eq.s32.totalorder %s29, 0
      %p77 = por %p75, %p76
      %s79 = sadd.s32 %s78, 1
      %p82 = scmp.eq.s32.totalorder %s23, 1
      %p83 = scmp.ne.s32.totalorder %s78, %s80
      %p84 = scmp.eq.s32.totalorder %s23, 0
      %p85 = por %p83, %p84
      %p86 = scmp.ne.s32.totalorder %s78, %s80
      %p87 = scmp.eq.s32.totalorder %s28, 1
      %p88 = por %p86, %p87
      %p89 = scmp.ne.s32.totalorder %s80, %s81
      %p90 = scmp.eq.s32.totalorder %s28, 0
      %p91 = por %p89, %p90
      %p92 = scmp.ne.s32.totalorder %s80, %s81
      %p93 = scmp.eq.s32.totalorder %s29, 1
      %p94 = por %p92, %p93
      %p96 = scmp.ne.s32.totalorder %s81, %s95
      %p97 = scmp.eq.s32.totalorder %s29, 0
      %p98 = por %p96, %p97
      %s100 = sadd.s32 %s99, 1
      %p103 = scmp.eq.s32.totalorder %s23, 1
      %p104 = scmp.ne.s32.totalorder %s99, %s101
      %p105 = scmp.eq.s32.totalorder %s23, 0
      %p106 = por %p104, %p105
      %p107 = scmp.ne.s32.totalorder %s99, %s101
      %p108 = scmp.eq.s32.totalorder %s28, 1
      %p109 = por %p107, %p108
      %p110 = scmp.ne.s32.totalorder %s101, %s102
      %p111 = scmp.eq.s32.totalorder %s28, 0
      %p112 = por %p110, %p111
      %p113 = scmp.ne.s32.totalorder %s101, %s102
      %p114 = scmp.eq.s32.totalorder %s29, 1
      %p115 = por %p113, %p114
      %p117 = scmp.ne.s32.totalorder %s102, %s116
      %p118 = scmp.eq.s32.totalorder %s29, 0
      %p119 = por %p117, %p118
      %s121 = sadd.s32 %s120, 1
      %p124 = scmp.eq.s32.totalorder %s23, 1
      %p125 = scmp.ne.s32.totalorder %s120, %s122
      %p126 = scmp.eq.s32.totalorder %s23, 0
      %p127 = por %p125, %p126
      %p128 = scmp.ne.s32.totalorder %s120, %s122
      %p129 = scmp.eq.s32.totalorder %s28, 1
      %p130 = por %p128, %p129
      %p131 = scmp.ne.s32.totalorder %s122, %s123
      %p132 = scmp.eq.s32.totalorder %s28, 0
      %p133 = por %p131, %p132
      %p134 = scmp.ne.s32.totalorder %s122, %s123
      %p135 = scmp.eq.s32.totalorder %s29, 1
      %p136 = por %p134, %p135
      %p138 = scmp.ne.s32.totalorder %s123, %s137
      %p139 = scmp.eq.s32.totalorder %s29, 0
      %p140 = por %p138, %p139
      %s142 = sadd.s32 %s141, 1
      %p145 = scmp.eq.s32.totalorder %s23, 1
      %p146 = scmp.ne.s32.totalorder %s141, %s143
      %p147 = scmp.eq.s32.totalorder %s23, 0
      %p148 = por %p146, %p147
      %p149 = scmp.ne.s32.totalorder %s141, %s143
      %p150 = scmp.eq.s32.totalorder %s28, 1
      %p151 = por %p149, %p150
      %p152 = scmp.ne.s32.totalorder %s143, %s144
      %p153 = scmp.eq.s32.totalorder %s28, 0
      %p154 = por %p152, %p153
      %p155 = scmp.ne.s32.totalorder %s143, %s144
      %p156 = scmp.eq.s32.totalorder %s29, 1
      %p157 = por %p155, %p156
      %p159 = scmp.ne.s32.totalorder %s144, %s158
      %p160 = scmp.eq.s32.totalorder %s29, 0
      %p161 = por %p159, %p160
      %s163 = sadd.s32 %s162, 1
      %p166 = scmp.eq.s32.totalorder %s23, 1
      %p167 = scmp.ne.s32.totalorder %s162, %s164
      %p168 = scmp.eq.s32.totalorder %s23, 0
      %p169 = por %p167, %p168
      %p170 = scmp.ne.s32.totalorder %s162, %s164
      %p171 = scmp.eq.s32.totalorder %s28, 1
      %p172 = por %p170, %p171
      %p173 = scmp.ne.s32.totalorder %s164, %s165
      %p174 = scmp.eq.s32.totalorder %s28, 0
      %p175 = por %p173, %p174
      %p176 = scmp.ne.s32.totalorder %s164, %s165
      %p177 = scmp.eq.s32.totalorder %s29, 1
      %p178 = por %p176, %p177
      %p180 = scmp.ne.s32.totalorder %s165, %s179
      %p181 = scmp.eq.s32.totalorder %s29, 0
      %p182 = por %p180, %p181
      %s184 = sadd.s32 %s183, 1
      %p187 = scmp.eq.s32.totalorder %s23, 1
      %p188 = scmp.ne.s32.totalorder %s183, %s185
      %p189 = scmp.eq.s32.totalorder %s23, 0
      %p190 = por %p188, %p189
      %p191 = scmp.ne.s32.totalorder %s183, %s185
      %p192 = scmp.eq.s32.totalorder %s28, 1
      %p193 = por %p191, %p192
      %p194 = scmp.ne.s32.totalorder %s185, %s186
      %p195 = scmp.eq.s32.totalorder %s28, 0
      %p196 = por %p194, %p195
      %p197 = scmp.ne.s32.totalorder %s185, %s186
      %p198 = scmp.eq.s32.totalorder %s29, 1
      %p199 = por %p197, %p198
      %p201 = scmp.ne.s32.totalorder %s186, %s200
      %p202 = scmp.eq.s32.totalorder %s29, 0
      %p203 = por %p201, %p202
      %s205 = sadd.s32 %s204, 1
      %p208 = scmp.eq.s32.totalorder %s23, 1
      %p209 = scmp.ne.s32.totalorder %s204, %s206
      %p210 = scmp.eq.s32.totalorder %s23, 0
      %p211 = por %p209, %p210
      %p212 = scmp.ne.s32.totalorder %s204, %s206
      %p213 = scmp.eq.s32.totalorder %s28, 1
      %p214 = por %p212, %p213
      %p215 = scmp.ne.s32.totalorder %s206, %s207
      %p216 = scmp.eq.s32.totalorder %s28, 0
      %p217 = por %p215, %p216
      %p218 = scmp.ne.s32.totalorder %s206, %s207
      %p219 = scmp.eq.s32.totalorder %s29, 1
      %p220 = por %p218, %p219
      %p222 = scmp.ne.s32.totalorder %s207, %s221
      %p223 = scmp.eq.s32.totalorder %s29, 0
      %p224 = por %p222, %p223
      %s226 = sadd.s32 %s225, 1
      %p229 = scmp.eq.s32.totalorder %s23, 1
      %p230 = scmp.ne.s32.totalorder %s225, %s227
      %p231 = scmp.eq.s32.totalorder %s23, 0
      %p232 = por %p230, %p231
      %p233 = scmp.ne.s32.totalorder %s225, %s227
      %p234 = scmp.eq.s32.totalorder %s28, 1
      %p235 = por %p233, %p234
      %p236 = scmp.ne.s32.totalorder %s227, %s228
      %p237 = scmp.eq.s32.totalorder %s28, 0
      %p238 = por %p236, %p237
      %p239 = scmp.ne.s32.totalorder %s227, %s228
      %p240 = scmp.eq.s32.totalorder %s29, 1
      %p241 = por %p239, %p240
      %p243 = scmp.ne.s32.totalorder %s228, %s242
      %p244 = scmp.eq.s32.totalorder %s29, 0
      %p245 = por %p243, %p244
      %s247 = sadd.s32 %s246, 1
      %p250 = scmp.eq.s32.totalorder %s23, 1
      %p251 = scmp.ne.s32.totalorder %s246, %s248
      %p252 = scmp.eq.s32.totalorder %s23, 0
      %p253 = por %p251, %p252
      %p254 = scmp.ne.s32.totalorder %s246, %s248
      %p255 = scmp.eq.s32.totalorder %s28, 1
      %p256 = por %p254, %p255
      %p257 = scmp.ne.s32.totalorder %s248, %s249
      %p258 = scmp.eq.s32.totalorder %s28, 0
      %p259 = por %p257, %p258
      %p260 = scmp.ne.s32.totalorder %s248, %s249
      %p261 = scmp.eq.s32.totalorder %s29, 1
      %p262 = por %p260, %p261
      %p264 = scmp.ne.s32.totalorder %s249, %s263
      %p265 = scmp.eq.s32.totalorder %s29, 0
      %p266 = por %p264, %p265
      %s267 = ssub.s32 %s23, %s30
      %p268 = scmp.eq.s32.totalorder %s267, 0
      %s270 = sadd.s32 %s269, 1
      %s271 = scalar_select %p268, %s269, %s270
      %p274 = pneg %p268
      %p275 = scmp.eq.s32.totalorder %s23, 1
      %p276 = por %p274, %p275
      %p277 = scmp.ne.s32.totalorder %s269, %s272
      %p278 = scmp.eq.s32.totalorder %s23, 0
      %p279 = por %p277, %p278
      %p280 = scmp.ne.s32.totalorder %s269, %s272
      %p281 = scmp.eq.s32.totalorder %s28, 1
      %p282 = por %p280, %p281
      %p283 = scmp.ne.s32.totalorder %s272, %s273
      %p284 = scmp.eq.s32.totalorder %s28, 0
      %p285 = por %p283, %p284
      %p286 = scmp.ne.s32.totalorder %s272, %s273
      %p287 = scmp.eq.s32.totalorder %s29, 1
      %p288 = por %p286, %p287
      %p290 = scmp.ne.s32.totalorder %s273, %s289
      %p291 = scmp.eq.s32.totalorder %s29, 0
      %p292 = por %p290, %p291
      %p293 = scmp.le.s32.totalorder 1, %s23
      %p294 = scmp.lt.s32.totalorder %s23, 3
      %p295 = pnand %p293, %p294
      %p296 = pneg %p295
      // Predicated region
      $region9: #{tpu_custom_call.1} parent=5 // pred_check
        _
      $region10: #{tpu_custom_call.1} parent=5 // pred_check_branch
        %298 = sbr.rel (%p295) target = $region12
      $region11: #{tpu_custom_call.1} parent=5 // pred_region
        %s299 = ssub.s32 %s23, 1
        // Predicated region
        $region13: #{tpu_custom_call.1} parent=11 // pred_check
          %p300 = pneg %p70
        $region14: #{tpu_custom_call.1} parent=11 // pred_check_branch
          %302 = sbr.rel (%p300) target = $region16
        $region15: #{tpu_custom_call.1} parent=11 // pred_region
          %s304 = ssub.s32 256, 256
          %305 = vsyncadd [#allocation3], %s304
          %s306 = sshll.u32 [#allocation2], 4
          %s307 = int_to_ptr.vmem [resolvable:$true] %s306
          %312 = dma.hbm_to_vmem [thread:$0]  %s1, 256, %s307, [#allocation3], 128, 128, 8
        $region16: #{tpu_custom_call.1} parent=11 // pred_fallthru
          _
        // Predicated region
        $region17: #{tpu_custom_call.1} parent=11 // pred_check
          %p313 = pneg %p91
        $region18: #{tpu_custom_call.1} parent=11 // pred_check_branch
          %315 = sbr.rel (%p313) target = $region20
        $region19: #{tpu_custom_call.1} parent=11 // pred_region
          _
        $region20: #{tpu_custom_call.1} parent=11 // pred_fallthru
          _
        // Predicated region
        $region21: #{tpu_custom_call.1} parent=11 // pred_check
          %p316 = pneg %p112
        $region22: #{tpu_custom_call.1} parent=11 // pred_check_branch
          %318 = sbr.rel (%p316) target = $region24
        $region23: #{tpu_custom_call.1} parent=11 // pred_region
          %s320 = ssub.s32 1024, 1024
          %321 = vsyncadd [#allocation6], %s320
          %s322 = sshll.u32 [#allocation5], 4
          %s323 = int_to_ptr.vmem [resolvable:$true] %s322
          %328 = dma.hbm_to_vmem [thread:$0]  %s3, 1024, %s323, [#allocation6], 64, 64, 4
        $region24: #{tpu_custom_call.1} parent=11 // pred_fallthru
          _
        // Predicated region
        $region25: #{tpu_custom_call.1} parent=11 // pred_check
          %p329 = pneg %p133
        $region26: #{tpu_custom_call.1} parent=11 // pred_check_branch
          %331 = sbr.rel (%p329) target = $region28
        $region27: #{tpu_custom_call.1} parent=11 // pred_region
          %s333 = ssub.s32 16, 16
          %334 = vsyncadd [#allocation6], %s333
          %s336 = sshll.u32 [#allocation7], 4
          %s337 = int_to_ptr.vmem [resolvable:$true] %s336
          %339 = dma.hbm_to_vmem [thread:$0]  %s4, 16, %s337, [#allocation6]
        $region28: #{tpu_custom_call.1} parent=11 // pred_fallthru
          _
        // Predicated region
        $region29: #{tpu_custom_call.1} parent=11 // pred_check
          %p340 = pneg %p154
        $region30: #{tpu_custom_call.1} parent=11 // pred_check_branch
          %342 = sbr.rel (%p340) target = $region32
        $region31: #{tpu_custom_call.1} parent=11 // pred_region
          _
        $region32: #{tpu_custom_call.1} parent=11 // pred_fallthru
          _
        // Predicated region
        $region33: #{tpu_custom_call.1} parent=11 // pred_check
          %p343 = pneg %p175
        $region34: #{tpu_custom_call.1} parent=11 // pred_check_branch
          %345 = sbr.rel (%p343) target = $region36
        $region35: #{tpu_custom_call.1} parent=11 // pred_region
          %s347 = ssub.s32 32, 32
          %348 = vsyncadd [#allocation9], %s347
          %s350 = sshll.u32 [#allocation8], 4
          %s351 = int_to_ptr.vmem [resolvable:$true] %s350
          %353 = dma.hbm_to_vmem [thread:$0]  %s6, 32, %s351, [#allocation9]
        $region36: #{tpu_custom_call.1} parent=11 // pred_fallthru
          _
        // Predicated region
        $region37: #{tpu_custom_call.1} parent=11 // pred_check
          %p354 = pneg %p196
        $region38: #{tpu_custom_call.1} parent=11 // pred_check_branch
          %356 = sbr.rel (%p354) target = $region40
        $region39: #{tpu_custom_call.1} parent=11 // pred_region
          _
        $region40: #{tpu_custom_call.1} parent=11 // pred_fallthru
          _
        // Predicated region
        $region41: #{tpu_custom_call.1} parent=11 // pred_check
          %p357 = pneg %p217
        $region42: #{tpu_custom_call.1} parent=11 // pred_check_branch
          %359 = sbr.rel (%p357) target = $region44
        $region43: #{tpu_custom_call.1} parent=11 // pred_region
          %s361 = ssub.s32 32, 32
          %362 = vsyncadd [#allocation9], %s361
          %s364 = sshll.u32 [#allocation10], 4
          %s365 = int_to_ptr.vmem [resolvable:$true] %s364
          %367 = dma.hbm_to_vmem [thread:$0]  %s8, 32, %s365, [#allocation9]
        $region44: #{tpu_custom_call.1} parent=11 // pred_fallthru
          _
        // Predicated region
        $region45: #{tpu_custom_call.1} parent=11 // pred_check
          %p368 = pneg %p238
        $region46: #{tpu_custom_call.1} parent=11 // pred_check_branch
          %370 = sbr.rel (%p368) target = $region48
        $region47: #{tpu_custom_call.1} parent=11 // pred_region
          _
        $region48: #{tpu_custom_call.1} parent=11 // pred_fallthru
          _
        // Predicated region
        $region49: #{tpu_custom_call.1} parent=11 // pred_check
          %p371 = pneg %p259
        $region50: #{tpu_custom_call.1} parent=11 // pred_check_branch
          %373 = sbr.rel (%p371) target = $region52
        $region51: #{tpu_custom_call.1} parent=11 // pred_region
          _
        $region52: #{tpu_custom_call.1} parent=11 // pred_fallthru
          _
      $region12: #{tpu_custom_call.1} parent=5 // pred_fallthru
        _
      %p374 = scmp.lt.s32.totalorder %s23, 2
      // Predicated region
      $region53: #{tpu_custom_call.1} parent=5 // pred_check
        %p375 = pneg %p374
      $region54: #{tpu_custom_call.1} parent=5 // pred_check_branch
        %377 = sbr.rel (%p375) target = $region56
      $region55: #{tpu_custom_call.1} parent=5 // pred_region
        // Predicated region
        $region57: #{tpu_custom_call.1} parent=55 // pred_check
          %p378 = pneg %p43
        $region58: #{tpu_custom_call.1} parent=55 // pred_check_branch
          %380 = sbr.rel (%p378) target = $region60
        $region59: #{tpu_custom_call.1} parent=55 // pred_region
          %s381 = smul.u32 16, %s23
          %p382 = scmp.lt.s32.totalorder %s381, 31
          %s383 = scalar_select %p382, %s381, 31
          %s384 = smul.addr %s383, 8
          %s385 = scalar_lea.vmem %s0, %s384
          %s386 = smul.u32 16, %s23
        $region60: #{tpu_custom_call.1} parent=55 // pred_fallthru
          _
      $region56: #{tpu_custom_call.1} parent=5 // pred_fallthru
        _
      %p387 = scmp.le.s32.totalorder 1, %s23
      %p388 = scmp.lt.s32.totalorder %s23, 3
      %p389 = pnand %p387, %p388
      %p390 = pneg %p389
      // Predicated region
      $region61: #{tpu_custom_call.1} parent=5 // pred_check
        _
      $region62: #{tpu_custom_call.1} parent=5 // pred_check_branch
        %392 = sbr.rel (%p389) target = $region64
      $region63: #{tpu_custom_call.1} parent=5 // pred_region
        %s393 = ssub.s32 %s23, 1
        // Predicated region
        $region65: #{tpu_custom_call.1} parent=63 // pred_check
          %p394 = pneg %p70
        $region66: #{tpu_custom_call.1} parent=63 // pred_check_branch
          %396 = sbr.rel (%p394) target = $region68
        $region67: #{tpu_custom_call.1} parent=63 // pred_region
          %397 = dma.done [#allocation3], 256
        $region68: #{tpu_custom_call.1} parent=63 // pred_fallthru
          _
        // Predicated region
        $region69: #{tpu_custom_call.1} parent=63 // pred_check
          %p398 = pneg %p112
        $region70: #{tpu_custom_call.1} parent=63 // pred_check_branch
          %400 = sbr.rel (%p398) target = $region72
        $region71: #{tpu_custom_call.1} parent=63 // pred_region
          %401 = dma.done [#allocation6], 1024
        $region72: #{tpu_custom_call.1} parent=63 // pred_fallthru
          _
        // Predicated region
        $region73: #{tpu_custom_call.1} parent=63 // pred_check
          %p402 = pneg %p133
        $region74: #{tpu_custom_call.1} parent=63 // pred_check_branch
          %404 = sbr.rel (%p402) target = $region76
        $region75: #{tpu_custom_call.1} parent=63 // pred_region
          %405 = dma.done [#allocation6], 16
        $region76: #{tpu_custom_call.1} parent=63 // pred_fallthru
          _
        // Predicated region
        $region77: #{tpu_custom_call.1} parent=63 // pred_check
          %p406 = pneg %p175
        $region78: #{tpu_custom_call.1} parent=63 // pred_check_branch
          %408 = sbr.rel (%p406) target = $region80
        $region79: #{tpu_custom_call.1} parent=63 // pred_region
          %409 = dma.done [#allocation9], 32
        $region80: #{tpu_custom_call.1} parent=63 // pred_fallthru
          _
        // Predicated region
        $region81: #{tpu_custom_call.1} parent=63 // pred_check
          %p410 = pneg %p217
        $region82: #{tpu_custom_call.1} parent=63 // pred_check_branch
          %412 = sbr.rel (%p410) target = $region84
        $region83: #{tpu_custom_call.1} parent=63 // pred_region
          %413 = dma.done [#allocation9], 32
        $region84: #{tpu_custom_call.1} parent=63 // pred_fallthru
          _
        %s414 = smul.u32 16, %s28
        %p415 = scmp.lt.s32.totalorder %s414, 31
        %s416 = scalar_select %p415, %s414, 31
        %s417 = smul.addr %s416, 8
        %s418 = scalar_lea.vmem %s0, %s417
        %p419 = pneg %p49
        %p420 = pneg %p46
        %p421 = pneg %p70
        %p422 = pneg %p67
        %p423 = pneg %p91
        %p424 = pneg %p88
        %p425 = pneg %p112
        %p426 = pneg %p109
        %p427 = pneg %p133
        %p428 = pneg %p130
        %p429 = pneg %p154
        %p430 = pneg %p151
        %p431 = pneg %p175
        %p432 = pneg %p172
        %p433 = pneg %p196
        %p434 = pneg %p193
        %p435 = pneg %p217
        %p436 = pneg %p214
        %p437 = pneg %p238
        %p438 = pneg %p235
        %p439 = pneg %p259
        %p440 = pneg %p256
        %p441 = pneg %p285
        %p442 = pneg %p282
        %s443 = sand.u32 %s272, 1
        %s444 = scalar_lea.sflag [#allocation4], %s443
        %s445 = sand.u32 %s272, 1
        %s446 = smul.addr %s445, 64
        %s447 = scalar_lea.vmem [#allocation11], %s446
        %s448 = smul.u32 16, %s28
        %p449 = scmp.lt.s32.totalorder %s448, 31
        %s450 = scalar_select %p449, %s448, 31
        %s451 = smul.addr %s450, 8
        %s452 = scalar_lea.vmem %s0, %s451
        %s453 = smul.u32 16, %s28
        %s454 = smul.u32 16, %s28
        %v456 = vld [vmem:[%s452] sm:$0xff]
        %v457 = vld [vmem:[%s452 + $0x8] sm:$0xff]
        %v458 = vld [vmem:[%s452 + $0x10] sm:$0xff]
        %v459 = vld [vmem:[%s452 + $0x18] sm:$0xff]
        %v460 = vld [vmem:[%s452 + $0x20] sm:$0xff]
        %v461 = vld [vmem:[%s452 + $0x28] sm:$0xff]
        %v462 = vld [vmem:[%s452 + $0x30] sm:$0xff]
        %v463 = vld [vmem:[%s452 + $0x38] sm:$0xff]
        %v464 = vld [vmem:[%s452 + $0x40] sm:$0xff]
        %v465 = vld [vmem:[%s452 + $0x48] sm:$0xff]
        %v466 = vld [vmem:[%s452 + $0x50] sm:$0xff]
        %v467 = vld [vmem:[%s452 + $0x58] sm:$0xff]
        %v468 = vld [vmem:[%s452 + $0x60] sm:$0xff]
        %v469 = vld [vmem:[%s452 + $0x68] sm:$0xff]
        %v470 = vld [vmem:[%s452 + $0x70] sm:$0xff]
        %v471 = vld [vmem:[%s452 + $0x78] sm:$0xff]
        %v472 = vpack.c.bf16 %v457, %v456
        %v473 = vpack.c.bf16 %v459, %v458
        %v474 = vpack.c.bf16 %v461, %v460
        %v475 = vpack.c.bf16 %v463, %v462
        %v476 = vpack.c.bf16 %v465, %v464
        %v477 = vpack.c.bf16 %v467, %v466
        %v478 = vpack.c.bf16 %v469, %v468
        %v479 = vpack.c.bf16 %v471, %v470
        %v480 = vld [vmem:[#allocation2] sm:$0xff]
        %v481 = vld [vmem:[#allocation2 + $0x8] sm:$0xff]
        %v482 = vld [vmem:[%s2] sm:$0x3]
        %v484 = vlaneseq
        %v485 = vshrl.u32 %v484, 7
        %v486 = vsub.s32 0, %v485
        %v487 = vrot.slane %v482, %v486
        %v488 = vlaneseq
        %v489 = vshrl.u32 %v488, 7
        %v490 = vsub.s32 1, %v489
        %v491 = vrot.slane %v482, %v490
        %v496 = vunpack.c.l.b16 %v480
        %v497 = vunpack.c.h.b16 %v480
        %v498 = vunpack.c.l.b16 %v481
        %v499 = vunpack.c.h.b16 %v481
        %v500 = vpack.c.b16 %v498, %v496
        %v501 = vpack.c.b16 %v499, %v497
        %vm504 = vcmask 130048
        %v506 = vsel %vm504, %v472, 0
        %v509 = vsel %vm504, %v473, 0
        %v512 = vsel %vm504, %v474, 0
        %v515 = vsel %vm504, %v475, 0
        %v518 = vsel %vm504, %v476, 0
        %v521 = vsel %vm504, %v477, 0
        %v524 = vsel %vm504, %v478, 0
        %v527 = vsel %vm504, %v479, 0
        %529 = vmatprep.subr.bf16.mxu0 %v501
        %530 = vmatpush1.bf16.msra.mxu0 %v500
        %531 = vmatprep.subr.bf16.mxu0 0
        %532 = vmatpush1.bf16.msra.mxu0 0
        %533 = vmatprep.subr.bf16.mxu0 0
        %534 = vmatpush1.bf16.msra.mxu0 0
        %535 = vmatprep.subr.bf16.mxu0 0
        %536 = vmatpush1.bf16.msra.mxu0 0
        %537 = vmatprep.subr.bf16.mxu0 0
        %538 = vmatpush1.bf16.msra.mxu0 0
        %539 = vmatprep.subr.bf16.mxu0 0
        %540 = vmatpush1.bf16.msra.mxu0 0
        %541 = vmatprep.subr.bf16.mxu0 0
        %542 = vmatpush1.bf16.msra.mxu0 0
        %543 = vmatprep.subr.bf16.mxu0 0
        %544 = vmatpush1.bf16.msra.mxu0 0
        %545 = vmatprep.subr.bf16.mxu0 0
        %546 = vmatpush1.bf16.msra.mxu0 0
        %547 = vmatprep.subr.bf16.mxu0 0
        %548 = vmatpush1.bf16.msra.mxu0 0
        %549 = vmatprep.subr.bf16.mxu0 0
        %550 = vmatpush1.bf16.msra.mxu0 0
        %551 = vmatprep.subr.bf16.mxu0 0
        %552 = vmatpush1.bf16.msra.mxu0 0
        %553 = vmatprep.subr.bf16.mxu0 0
        %554 = vmatpush1.bf16.msra.mxu0 0
        %555 = vmatprep.subr.bf16.mxu0 0
        %556 = vmatpush1.bf16.msra.mxu0 0
        %557 = vmatprep.subr.bf16.mxu0 0
        %558 = vmatpush1.bf16.msra.mxu0 0
        %559 = vmatprep.subr.bf16.mxu0 0
        %560 = vmatpush1.bf16.msra.mxu0 0
        %561 = vmatprep.mubr.bf16.mxu0 0
        %562 = vmatmul.mubr.bf16.gmra.mrb[0].mxu0 %v506
        %v563 = vpop.f32.mrb[0].mxu0
        %v564 = vadd.f32 %v487, %v563
        %v565 = vpop.f32.mrb[0].mxu0
        %v566 = vadd.f32 %v491, %v565
        %v567 = vpop.f32.mrb[0].mxu0
        %v568 = vadd.f32 %v487, %v567
        %v569 = vpop.f32.mrb[0].mxu0
        %v570 = vadd.f32 %v491, %v569
        %571 = vmatprep.mubr.bf16.mxu0 0
        %572 = vmatmul.mubr.bf16.gmra.mrb[0].mxu0 %v509
        %v573 = vpop.f32.mrb[0].mxu0
        %v574 = vadd.f32 %v487, %v573
        %v575 = vpop.f32.mrb[0].mxu0
        %v576 = vadd.f32 %v491, %v575
        %v577 = vpop.f32.mrb[0].mxu0
        %v578 = vadd.f32 %v487, %v577
        %v579 = vpop.f32.mrb[0].mxu0
        %v580 = vadd.f32 %v491, %v579
        %581 = vmatprep.mubr.bf16.mxu0 0
        %582 = vmatmul.mubr.bf16.gmra.mrb[0].mxu0 %v512
        %v583 = vpop.f32.mrb[0].mxu0
        %v584 = vadd.f32 %v487, %v583
        %v585 = vpop.f32.mrb[0].mxu0
        %v586 = vadd.f32 %v491, %v585
        %v587 = vpop.f32.mrb[0].mxu0
        %v588 = vadd.f32 %v487, %v587
        %v589 = vpop.f32.mrb[0].mxu0
        %v590 = vadd.f32 %v491, %v589
        %591 = vmatprep.mubr.bf16.mxu0 0
        %592 = vmatmul.mubr.bf16.gmra.mrb[0].mxu0 %v515
        %v593 = vpop.f32.mrb[0].mxu0
        %v594 = vadd.f32 %v487, %v593
        %v595 = vpop.f32.mrb[0].mxu0
        %v596 = vadd.f32 %v491, %v595
        %v597 = vpop.f32.mrb[0].mxu0
        %v598 = vadd.f32 %v487, %v597
        %v599 = vpop.f32.mrb[0].mxu0
        %v600 = vadd.f32 %v491, %v599
        %601 = vmatprep.mubr.bf16.mxu0 0
        %602 = vmatmul.mubr.bf16.gmra.mrb[0].mxu0 %v518
        %v603 = vpop.f32.mrb[0].mxu0
        %v604 = vadd.f32 %v487, %v603
        %v605 = vpop.f32.mrb[0].mxu0
        %v606 = vadd.f32 %v491, %v605
        %v607 = vpop.f32.mrb[0].mxu0
        %v608 = vadd.f32 %v487, %v607
        %v609 = vpop.f32.mrb[0].mxu0
        %v610 = vadd.f32 %v491, %v609
        %611 = vmatprep.mubr.bf16.mxu0 0
        %612 = vmatmul.mubr.bf16.gmra.mrb[0].mxu0 %v521
        %v613 = vpop.f32.mrb[0].mxu0
        %v614 = vadd.f32 %v487, %v613
        %v615 = vpop.f32.mrb[0].mxu0
        %v616 = vadd.f32 %v491, %v615
        %v617 = vpop.f32.mrb[0].mxu0
        %v618 = vadd.f32 %v487, %v617
        %v619 = vpop.f32.mrb[0].mxu0
        %v620 = vadd.f32 %v491, %v619
        %621 = vmatprep.mubr.bf16.mxu0 0
        %622 = vmatmul.mubr.bf16.gmra.mrb[0].mxu0 %v524
        %v623 = vpop.f32.mrb[0].mxu0
        %v624 = vadd.f32 %v487, %v623
        %v625 = vpop.f32.mrb[0].mxu0
        %v626 = vadd.f32 %v491, %v625
        %v627 = vpop.f32.mrb[0].mxu0
        %v628 = vadd.f32 %v487, %v627
        %v629 = vpop.f32.mrb[0].mxu0
        %v630 = vadd.f32 %v491, %v629
        %631 = vmatprep.mubr.bf16.mxu0 0
        %632 = vmatmul.mubr.bf16.gmra.mrb[0].mxu0 %v527
        %v633 = vpop.f32.mrb[0].mxu0
        %v634 = vadd.f32 %v487, %v633
        %v635 = vpop.f32.mrb[0].mxu0
        %v636 = vadd.f32 %v491, %v635
        %v637 = vpop.f32.mrb[0].mxu0
        %v638 = vadd.f32 %v487, %v637
        %v639 = vpop.f32.mrb[0].mxu0
        %v640 = vadd.f32 %v491, %v639
        %641 = vdwg.mxu0
        %v642 = vmax.f32 %v564, 0.0
        %v643 = vmax.f32 %v568, 0.0
        %v644 = vmax.f32 %v574, 0.0
        %v645 = vmax.f32 %v578, 0.0
        %v646 = vmax.f32 %v584, 0.0
        %v647 = vmax.f32 %v588, 0.0
        %v648 = vmax.f32 %v594, 0.0
        %v649 = vmax.f32 %v598, 0.0
        %v650 = vmax.f32 %v604, 0.0
        %v651 = vmax.f32 %v608, 0.0
        %v652 = vmax.f32 %v614, 0.0
        %v653 = vmax.f32 %v618, 0.0
        %v654 = vmax.f32 %v624, 0.0
        %v655 = vmax.f32 %v628, 0.0
        %v656 = vmax.f32 %v634, 0.0
        %v657 = vmax.f32 %v638, 0.0
        %v658 = vadd.f32 %v642, %v566
        %v659 = vadd.f32 %v643, %v570
        %v660 = vadd.f32 %v644, %v576
        %v661 = vadd.f32 %v645, %v580
        %v662 = vadd.f32 %v646, %v586
        %v663 = vadd.f32 %v647, %v590
        %v664 = vadd.f32 %v648, %v596
        %v665 = vadd.f32 %v649, %v600
        %v666 = vadd.f32 %v650, %v606
        %v667 = vadd.f32 %v651, %v610
        %v668 = vadd.f32 %v652, %v616
        %v669 = vadd.f32 %v653, %v620
        %v670 = vadd.f32 %v654, %v626
        %v671 = vadd.f32 %v655, %v630
        %v672 = vadd.f32 %v656, %v636
        %v673 = vadd.f32 %v657, %v640
        %v674 = vpack.c.bf16 %v659, %v658
        %v675 = vpack.c.bf16 %v661, %v660
        %v676 = vpack.c.bf16 %v663, %v662
        %v677 = vpack.c.bf16 %v665, %v664
        %v678 = vpack.c.bf16 %v667, %v666
        %v679 = vpack.c.bf16 %v669, %v668
        %v680 = vpack.c.bf16 %v671, %v670
        %v681 = vpack.c.bf16 %v673, %v672
        %v682 = vld [vmem:[#allocation5] sm:$0xf]
        %v683 = vld [vmem:[#allocation5 + $0x4] sm:$0xf]
        %v684 = vld [vmem:[#allocation5 + $0x8] sm:$0xf]
        %v685 = vld [vmem:[#allocation5 + $0xc] sm:$0xf]
        %v686 = vld [vmem:[#allocation5 + $0x10] sm:$0xf]
        %v687 = vld [vmem:[#allocation5 + $0x14] sm:$0xf]
        %v688 = vld [vmem:[#allocation5 + $0x18] sm:$0xf]
        %v689 = vld [vmem:[#allocation5 + $0x1c] sm:$0xf]
        %v690 = vld [vmem:[#allocation5 + $0x20] sm:$0xf]
        %v691 = vld [vmem:[#allocation5 + $0x24] sm:$0xf]
        %v692 = vld [vmem:[#allocation5 + $0x28] sm:$0xf]
        %v693 = vld [vmem:[#allocation5 + $0x2c] sm:$0xf]
        %v694 = vld [vmem:[#allocation5 + $0x30] sm:$0xf]
        %v695 = vld [vmem:[#allocation5 + $0x34] sm:$0xf]
        %v696 = vld [vmem:[#allocation5 + $0x38] sm:$0xf]
        %v697 = vld [vmem:[#allocation5 + $0x3c] sm:$0xf]
        %v698 = vld [vmem:[#allocation7] sm:$0x1]
        %v700 = vlaneseq
        %v701 = vshrl.u32 %v700, 7
        %v702 = vsub.s32 0, %v701
        %v703 = vrot.slane %v698, %v702
        %v721 = vunpack.c.l.b16 %v682
        %v722 = vunpack.c.l.b16 %v683
        %v723 = vunpack.c.l.b16 %v684
        %v724 = vunpack.c.l.b16 %v685
        %v725 = vunpack.c.l.b16 %v686
        %v726 = vunpack.c.l.b16 %v687
        %v727 = vunpack.c.l.b16 %v688
        %v728 = vunpack.c.l.b16 %v689
        %v729 = vunpack.c.l.b16 %v690
        %v730 = vunpack.c.l.b16 %v691
        %v731 = vunpack.c.l.b16 %v692
        %v732 = vunpack.c.l.b16 %v693
        %v733 = vunpack.c.l.b16 %v694
        %v734 = vunpack.c.l.b16 %v695
        %v735 = vunpack.c.l.b16 %v696
        %v736 = vunpack.c.l.b16 %v697
        %v737 = vpack.c.b16 %v722, %v721
        %v738 = vpack.c.b16 %v724, %v723
        %v739 = vpack.c.b16 %v726, %v725
        %v740 = vpack.c.b16 %v728, %v727
        %v741 = vpack.c.b16 %v730, %v729
        %v742 = vpack.c.b16 %v732, %v731
        %v743 = vpack.c.b16 %v734, %v733
        %v744 = vpack.c.b16 %v736, %v735
        %753 = vmatprep.subr.bf16.mxu0 0
        %754 = vmatpush1.bf16.msra.mxu0 %v737
        %755 = vmatprep.subr.bf16.mxu0 0
        %756 = vmatpush1.bf16.msra.mxu0 %v738
        %757 = vmatprep.subr.bf16.mxu0 0
        %758 = vmatpush1.bf16.msra.mxu0 %v739
        %759 = vmatprep.subr.bf16.mxu0 0
        %760 = vmatpush1.bf16.msra.mxu0 %v740
        %761 = vmatprep.subr.bf16.mxu0 0
        %762 = vmatpush1.bf16.msra.mxu0 %v741
        %763 = vmatprep.subr.bf16.mxu0 0
        %764 = vmatpush1.bf16.msra.mxu0 %v742
        %765 = vmatprep.subr.bf16.mxu0 0
        %766 = vmatpush1.bf16.msra.mxu0 %v743
        %767 = vmatprep.subr.bf16.mxu0 0
        %768 = vmatpush1.bf16.msra.mxu0 %v744
        %769 = vmatprep.subr.bf16.mxu0 0
        %770 = vmatpush1.bf16.msra.mxu0 0
        %771 = vmatprep.subr.bf16.mxu0 0
        %772 = vmatpush1.bf16.msra.mxu0 0
        %773 = vmatprep.subr.bf16.mxu0 0
        %774 = vmatpush1.bf16.msra.mxu0 0
        %775 = vmatprep.subr.bf16.mxu0 0
        %776 = vmatpush1.bf16.msra.mxu0 0
        %777 = vmatprep.subr.bf16.mxu0 0
        %778 = vmatpush1.bf16.msra.mxu0 0
        %779 = vmatprep.subr.bf16.mxu0 0
        %780 = vmatpush1.bf16.msra.mxu0 0
        %781 = vmatprep.subr.bf16.mxu0 0
        %782 = vmatpush1.bf16.msra.mxu0 0
        %783 = vmatprep.subr.bf16.mxu0 0
        %784 = vmatpush1.bf16.msra.mxu0 0
        %785 = vmatprep.mubr.bf16.mxu0 0
        %786 = vmatmul.mubr.bf16.gmra.mrb[0].mxu0 %v674
        %v787 = vpop.f32.mrb[0].mxu0
        %v788 = vadd.f32 %v703, %v787
        %v789 = vpop.f32.mrb[0].mxu0
        %v790 = vpop.f32.mrb[0].mxu0
        %v791 = vadd.f32 %v703, %v790
        %v792 = vpop.f32.mrb[0].mxu0
        %793 = vmatprep.mubr.bf16.mxu0 0
        %794 = vmatmul.mubr.bf16.gmra.mrb[0].mxu0 %v675
        %v795 = vpop.f32.mrb[0].mxu0
        %v796 = vadd.f32 %v703, %v795
        %v797 = vpop.f32.mrb[0].mxu0
        %v798 = vpop.f32.mrb[0].mxu0
        %v799 = vadd.f32 %v703, %v798
        %v800 = vpop.f32.mrb[0].mxu0
        %801 = vmatprep.mubr.bf16.mxu0 0
        %802 = vmatmul.mubr.bf16.gmra.mrb[0].mxu0 %v676
        %v803 = vpop.f32.mrb[0].mxu0
        %v804 = vadd.f32 %v703, %v803
        %v805 = vpop.f32.mrb[0].mxu0
        %v806 = vpop.f32.mrb[0].mxu0
        %v807 = vadd.f32 %v703, %v806
        %v808 = vpop.f32.mrb[0].mxu0
        %809 = vmatprep.mubr.bf16.mxu0 0
        %810 = vmatmul.mubr.bf16.gmra.mrb[0].mxu0 %v677
        %v811 = vpop.f32.mrb[0].mxu0
        %v812 = vadd.f32 %v703, %v811
        %v813 = vpop.f32.mrb[0].mxu0
        %v814 = vpop.f32.mrb[0].mxu0
        %v815 = vadd.f32 %v703, %v814
        %v816 = vpop.f32.mrb[0].mxu0
        %817 = vmatprep.mubr.bf16.mxu0 0
        %818 = vmatmul.mubr.bf16.gmra.mrb[0].mxu0 %v678
        %v819 = vpop.f32.mrb[0].mxu0
        %v820 = vadd.f32 %v703, %v819
        %v821 = vpop.f32.mrb[0].mxu0
        %v822 = vpop.f32.mrb[0].mxu0
        %v823 = vadd.f32 %v703, %v822
        %v824 = vpop.f32.mrb[0].mxu0
        %825 = vmatprep.mubr.bf16.mxu0 0
        %826 = vmatmul.mubr.bf16.gmra.mrb[0].mxu0 %v679
        %v827 = vpop.f32.mrb[0].mxu0
        %v828 = vadd.f32 %v703, %v827
        %v829 = vpop.f32.mrb[0].mxu0
        %v830 = vpop.f32.mrb[0].mxu0
        %v831 = vadd.f32 %v703, %v830
        %v832 = vpop.f32.mrb[0].mxu0
        %833 = vmatprep.mubr.bf16.mxu0 0
        %834 = vmatmul.mubr.bf16.gmra.mrb[0].mxu0 %v680
        %v835 = vpop.f32.mrb[0].mxu0
        %v836 = vadd.f32 %v703, %v835
        %v837 = vpop.f32.mrb[0].mxu0
        %v838 = vpop.f32.mrb[0].mxu0
        %v839 = vadd.f32 %v703, %v838
        %v840 = vpop.f32.mrb[0].mxu0
        %841 = vmatprep.mubr.bf16.mxu0 0
        %842 = vmatmul.mubr.bf16.gmra.mrb[0].mxu0 %v681
        %v843 = vpop.f32.mrb[0].mxu0
        %v844 = vadd.f32 %v703, %v843
        %v845 = vpop.f32.mrb[0].mxu0
        %v846 = vpop.f32.mrb[0].mxu0
        %v847 = vadd.f32 %v703, %v846
        %v848 = vpop.f32.mrb[0].mxu0
        %849 = vdwg.mxu0
        %v850 = vmax.f32 %v788, 0.0
        %v851 = vmax.f32 %v791, 0.0
        %v852 = vmax.f32 %v796, 0.0
        %v853 = vmax.f32 %v799, 0.0
        %v854 = vmax.f32 %v804, 0.0
        %v855 = vmax.f32 %v807, 0.0
        %v856 = vmax.f32 %v812, 0.0
        %v857 = vmax.f32 %v815, 0.0
        %v858 = vmax.f32 %v820, 0.0
        %v859 = vmax.f32 %v823, 0.0
        %v860 = vmax.f32 %v828, 0.0
        %v861 = vmax.f32 %v831, 0.0
        %v862 = vmax.f32 %v836, 0.0
        %v863 = vmax.f32 %v839, 0.0
        %v864 = vmax.f32 %v844, 0.0
        %v865 = vmax.f32 %v847, 0.0
        %v866 = vadd.f32 %v850, %v658
        %v867 = vadd.f32 %v851, %v659
        %v868 = vadd.f32 %v852, %v660
        %v869 = vadd.f32 %v853, %v661
        %v870 = vadd.f32 %v854, %v662
        %v871 = vadd.f32 %v855, %v663
        %v872 = vadd.f32 %v856, %v664
        %v873 = vadd.f32 %v857, %v665
        %v874 = vadd.f32 %v858, %v666
        %v875 = vadd.f32 %v859, %v667
        %v876 = vadd.f32 %v860, %v668
        %v877 = vadd.f32 %v861, %v669
        %v878 = vadd.f32 %v862, %v670
        %v879 = vadd.f32 %v863, %v671
        %v880 = vadd.f32 %v864, %v672
        %v881 = vadd.f32 %v865, %v673
        %v882 = vpack.c.bf16 %v867, %v866
        %v883 = vpack.c.bf16 %v869, %v868
        %v884 = vpack.c.bf16 %v871, %v870
        %v885 = vpack.c.bf16 %v873, %v872
        %v886 = vpack.c.bf16 %v875, %v874
        %v887 = vpack.c.bf16 %v877, %v876
        %v888 = vpack.c.bf16 %v879, %v878
        %v889 = vpack.c.bf16 %v881, %v880
        %v890 = vld [vmem:[%s5] sm:$0xff]
        %v891 = vld [vmem:[%s5 + $0x8] sm:$0xff]
        %v892 = vld [vmem:[%s5 + $0x10] sm:$0xff]
        %v893 = vld [vmem:[%s5 + $0x18] sm:$0xff]
        %v894 = vld [vmem:[%s5 + $0x20] sm:$0xff]
        %v895 = vld [vmem:[%s5 + $0x28] sm:$0xff]
        %v896 = vld [vmem:[%s5 + $0x30] sm:$0xff]
        %v897 = vld [vmem:[%s5 + $0x38] sm:$0xff]
        %v898 = vld [vmem:[%s5 + $0x40] sm:$0xff]
        %v899 = vld [vmem:[%s5 + $0x48] sm:$0xff]
        %v900 = vld [vmem:[%s5 + $0x50] sm:$0xff]
        %v901 = vld [vmem:[%s5 + $0x58] sm:$0xff]
        %v902 = vld [vmem:[%s5 + $0x60] sm:$0xff]
        %v903 = vld [vmem:[%s5 + $0x68] sm:$0xff]
        %v904 = vld [vmem:[%s5 + $0x70] sm:$0xff]
        %v905 = vld [vmem:[%s5 + $0x78] sm:$0xff]
        %v906 = vld [vmem:[#allocation8] sm:$0x3]
        %v908 = vlaneseq
        %v909 = vshrl.u32 %v908, 7
        %v910 = vsub.s32 0, %v909
        %v911 = vrot.slane %v906, %v910
        %v912 = vlaneseq
        %v913 = vshrl.u32 %v912, 7
        %v914 = vsub.s32 1, %v913
        %v915 = vrot.slane %v906, %v914
        %v934 = vunpack.c.l.b16 %v890
        %v935 = vunpack.c.h.b16 %v890
        %v936 = vunpack.c.l.b16 %v891
        %v937 = vunpack.c.h.b16 %v891
        %v938 = vunpack.c.l.b16 %v892
        %v939 = vunpack.c.h.b16 %v892
        %v940 = vunpack.c.l.b16 %v893
        %v941 = vunpack.c.h.b16 %v893
        %v942 = vunpack.c.l.b16 %v894
        %v943 = vunpack.c.h.b16 %v894
        %v944 = vunpack.c.l.b16 %v895
        %v945 = vunpack.c.h.b16 %v895
        %v946 = vunpack.c.l.b16 %v896
        %v947 = vunpack.c.h.b16 %v896
        %v948 = vunpack.c.l.b16 %v897
        %v949 = vunpack.c.h.b16 %v897
        %v950 = vunpack.c.l.b16 %v898
        %v951 = vunpack.c.h.b16 %v898
        %v952 = vunpack.c.l.b16 %v899
        %v953 = vunpack.c.h.b16 %v899
        %v954 = vunpack.c.l.b16 %v900
        %v955 = vunpack.c.h.b16 %v900
        %v956 = vunpack.c.l.b16 %v901
        %v957 = vunpack.c.h.b16 %v901
        %v958 = vunpack.c.l.b16 %v902
        %v959 = vunpack.c.h.b16 %v902
        %v960 = vunpack.c.l.b16 %v903
        %v961 = vunpack.c.h.b16 %v903
        %v962 = vunpack.c.l.b16 %v904
        %v963 = vunpack.c.h.b16 %v904
        %v964 = vunpack.c.l.b16 %v905
        %v965 = vunpack.c.h.b16 %v905
        %v966 = vpack.c.b16 %v936, %v934
        %v967 = vpack.c.b16 %v937, %v935
        %v968 = vpack.c.b16 %v940, %v938
        %v969 = vpack.c.b16 %v941, %v939
        %v970 = vpack.c.b16 %v944, %v942
        %v971 = vpack.c.b16 %v945, %v943
        %v972 = vpack.c.b16 %v948, %v946
        %v973 = vpack.c.b16 %v949, %v947
        %v974 = vpack.c.b16 %v952, %v950
        %v975 = vpack.c.b16 %v953, %v951
        %v976 = vpack.c.b16 %v956, %v954
        %v977 = vpack.c.b16 %v957, %v955
        %v978 = vpack.c.b16 %v960, %v958
        %v979 = vpack.c.b16 %v961, %v959
        %v980 = vpack.c.b16 %v964, %v962
        %v981 = vpack.c.b16 %v965, %v963
        %998 = vmatprep.subr.bf16.mxu0 %v967
        %999 = vmatpush1.bf16.msra.mxu0 %v966
        %1000 = vmatprep.subr.bf16.mxu0 %v969
        %1001 = vmatpush1.bf16.msra.mxu0 %v968
        %1002 = vmatprep.subr.bf16.mxu0 %v971
        %1003 = vmatpush1.bf16.msra.mxu0 %v970
        %1004 = vmatprep.subr.bf16.mxu0 %v973
        %1005 = vmatpush1.bf16.msra.mxu0 %v972
        %1006 = vmatprep.subr.bf16.mxu0 %v975
        %1007 = vmatpush1.bf16.msra.mxu0 %v974
        %1008 = vmatprep.subr.bf16.mxu0 %v977
        %1009 = vmatpush1.bf16.msra.mxu0 %v976
        %1010 = vmatprep.subr.bf16.mxu0 %v979
        %1011 = vmatpush1.bf16.msra.mxu0 %v978
        %1012 = vmatprep.subr.bf16.mxu0 %v981
        %1013 = vmatpush1.bf16.msra.mxu0 %v980
        %1014 = vmatprep.subr.bf16.mxu0 0
        %1015 = vmatpush1.bf16.msra.mxu0 0
        %1016 = vmatprep.subr.bf16.mxu0 0
        %1017 = vmatpush1.bf16.msra.mxu0 0
        %1018 = vmatprep.subr.bf16.mxu0 0
        %1019 = vmatpush1.bf16.msra.mxu0 0
        %1020 = vmatprep.subr.bf16.mxu0 0
        %1021 = vmatpush1.bf16.msra.mxu0 0
        %1022 = vmatprep.subr.bf16.mxu0 0
        %1023 = vmatpush1.bf16.msra.mxu0 0
        %1024 = vmatprep.subr.bf16.mxu0 0
        %1025 = vmatpush1.bf16.msra.mxu0 0
        %1026 = vmatprep.subr.bf16.mxu0 0
        %1027 = vmatpush1.bf16.msra.mxu0 0
        %1028 = vmatprep.subr.bf16.mxu0 0
        %1029 = vmatpush1.bf16.msra.mxu0 0
        %1030 = vmatprep.mubr.bf16.mxu0 0
        %1031 = vmatmul.mubr.bf16.gmra.mrb[0].mxu0 %v882
        %v1032 = vpop.f32.mrb[0].mxu0
        %v1033 = vadd.f32 %v911, %v1032
        %v1034 = vpop.f32.mrb[0].mxu0
        %v1035 = vadd.f32 %v915, %v1034
        %v1036 = vpop.f32.mrb[0].mxu0
        %v1037 = vadd.f32 %v911, %v1036
        %v1038 = vpop.f32.mrb[0].mxu0
        %v1039 = vadd.f32 %v915, %v1038
        %1040 = vmatprep.mubr.bf16.mxu0 0
        %1041 = vmatmul.mubr.bf16.gmra.mrb[0].mxu0 %v883
        %v1042 = vpop.f32.mrb[0].mxu0
        %v1043 = vadd.f32 %v911, %v1042
        %v1044 = vpop.f32.mrb[0].mxu0
        %v1045 = vadd.f32 %v915, %v1044
        %v1046 = vpop.f32.mrb[0].mxu0
        %v1047 = vadd.f32 %v911, %v1046
        %v1048 = vpop.f32.mrb[0].mxu0
        %v1049 = vadd.f32 %v915, %v1048
        %1050 = vmatprep.mubr.bf16.mxu0 0
        %1051 = vmatmul.mubr.bf16.gmra.mrb[0].mxu0 %v884
        %v1052 = vpop.f32.mrb[0].mxu0
        %v1053 = vadd.f32 %v911, %v1052
        %v1054 = vpop.f32.mrb[0].mxu0
        %v1055 = vadd.f32 %v915, %v1054
        %v1056 = vpop.f32.mrb[0].mxu0
        %v1057 = vadd.f32 %v911, %v1056
        %v1058 = vpop.f32.mrb[0].mxu0
        %v1059 = vadd.f32 %v915, %v1058
        %1060 = vmatprep.mubr.bf16.mxu0 0
        %1061 = vmatmul.mubr.bf16.gmra.mrb[0].mxu0 %v885
        %v1062 = vpop.f32.mrb[0].mxu0
        %v1063 = vadd.f32 %v911, %v1062
        %v1064 = vpop.f32.mrb[0].mxu0
        %v1065 = vadd.f32 %v915, %v1064
        %v1066 = vpop.f32.mrb[0].mxu0
        %v1067 = vadd.f32 %v911, %v1066
        %v1068 = vpop.f32.mrb[0].mxu0
        %v1069 = vadd.f32 %v915, %v1068
        %1070 = vmatprep.mubr.bf16.mxu0 0
        %1071 = vmatmul.mubr.bf16.gmra.mrb[0].mxu0 %v886
        %v1072 = vpop.f32.mrb[0].mxu0
        %v1073 = vadd.f32 %v911, %v1072
        %v1074 = vpop.f32.mrb[0].mxu0
        %v1075 = vadd.f32 %v915, %v1074
        %v1076 = vpop.f32.mrb[0].mxu0
        %v1077 = vadd.f32 %v911, %v1076
        %v1078 = vpop.f32.mrb[0].mxu0
        %v1079 = vadd.f32 %v915, %v1078
        %1080 = vmatprep.mubr.bf16.mxu0 0
        %1081 = vmatmul.mubr.bf16.gmra.mrb[0].mxu0 %v887
        %v1082 = vpop.f32.mrb[0].mxu0
        %v1083 = vadd.f32 %v911, %v1082
        %v1084 = vpop.f32.mrb[0].mxu0
        %v1085 = vadd.f32 %v915, %v1084
        %v1086 = vpop.f32.mrb[0].mxu0
        %v1087 = vadd.f32 %v911, %v1086
        %v1088 = vpop.f32.mrb[0].mxu0
        %v1089 = vadd.f32 %v915, %v1088
        %1090 = vmatprep.mubr.bf16.mxu0 0
        %1091 = vmatmul.mubr.bf16.gmra.mrb[0].mxu0 %v888
        %v1092 = vpop.f32.mrb[0].mxu0
        %v1093 = vadd.f32 %v911, %v1092
        %v1094 = vpop.f32.mrb[0].mxu0
        %v1095 = vadd.f32 %v915, %v1094
        %v1096 = vpop.f32.mrb[0].mxu0
        %v1097 = vadd.f32 %v911, %v1096
        %v1098 = vpop.f32.mrb[0].mxu0
        %v1099 = vadd.f32 %v915, %v1098
        %1100 = vmatprep.mubr.bf16.mxu0 0
        %1101 = vmatmul.mubr.bf16.gmra.mrb[0].mxu0 %v889
        %v1102 = vpop.f32.mrb[0].mxu0
        %v1103 = vadd.f32 %v911, %v1102
        %v1104 = vpop.f32.mrb[0].mxu0
        %v1105 = vadd.f32 %v915, %v1104
        %v1106 = vpop.f32.mrb[0].mxu0
        %v1107 = vadd.f32 %v911, %v1106
        %v1108 = vpop.f32.mrb[0].mxu0
        %v1109 = vadd.f32 %v915, %v1108
        %1110 = vdwg.mxu0
        %v1111 = vmax.f32 %v1033, 0.0
        %v1112 = vmax.f32 %v1037, 0.0
        %v1113 = vmax.f32 %v1043, 0.0
        %v1114 = vmax.f32 %v1047, 0.0
        %v1115 = vmax.f32 %v1053, 0.0
        %v1116 = vmax.f32 %v1057, 0.0
        %v1117 = vmax.f32 %v1063, 0.0
        %v1118 = vmax.f32 %v1067, 0.0
        %v1119 = vmax.f32 %v1073, 0.0
        %v1120 = vmax.f32 %v1077, 0.0
        %v1121 = vmax.f32 %v1083, 0.0
        %v1122 = vmax.f32 %v1087, 0.0
        %v1123 = vmax.f32 %v1093, 0.0
        %v1124 = vmax.f32 %v1097, 0.0
        %v1125 = vmax.f32 %v1103, 0.0
        %v1126 = vmax.f32 %v1107, 0.0
        %v1127 = vadd.f32 %v1111, %v1035
        %v1128 = vadd.f32 %v1112, %v1039
        %v1129 = vadd.f32 %v1113, %v1045
        %v1130 = vadd.f32 %v1114, %v1049
        %v1131 = vadd.f32 %v1115, %v1055
        %v1132 = vadd.f32 %v1116, %v1059
        %v1133 = vadd.f32 %v1117, %v1065
        %v1134 = vadd.f32 %v1118, %v1069
        %v1135 = vadd.f32 %v1119, %v1075
        %v1136 = vadd.f32 %v1120, %v1079
        %v1137 = vadd.f32 %v1121, %v1085
        %v1138 = vadd.f32 %v1122, %v1089
        %v1139 = vadd.f32 %v1123, %v1095
        %v1140 = vadd.f32 %v1124, %v1099
        %v1141 = vadd.f32 %v1125, %v1105
        %v1142 = vadd.f32 %v1126, %v1109
        %v1143 = vpack.c.bf16 %v1128, %v1127
        %v1144 = vpack.c.bf16 %v1130, %v1129
        %v1145 = vpack.c.bf16 %v1132, %v1131
        %v1146 = vpack.c.bf16 %v1134, %v1133
        %v1147 = vpack.c.bf16 %v1136, %v1135
        %v1148 = vpack.c.bf16 %v1138, %v1137
        %v1149 = vpack.c.bf16 %v1140, %v1139
        %v1150 = vpack.c.bf16 %v1142, %v1141
        %v1151 = vld [vmem:[%s7] sm:$0xff]
        %v1152 = vld [vmem:[%s7 + $0x8] sm:$0xff]
        %v1153 = vld [vmem:[%s7 + $0x10] sm:$0xff]
        %v1154 = vld [vmem:[%s7 + $0x18] sm:$0xff]
        %v1155 = vld [vmem:[%s7 + $0x20] sm:$0xff]
        %v1156 = vld [vmem:[%s7 + $0x28] sm:$0xff]
        %v1157 = vld [vmem:[%s7 + $0x30] sm:$0xff]
        %v1158 = vld [vmem:[%s7 + $0x38] sm:$0xff]
        %v1159 = vld [vmem:[%s7 + $0x40] sm:$0xff]
        %v1160 = vld [vmem:[%s7 + $0x48] sm:$0xff]
        %v1161 = vld [vmem:[%s7 + $0x50] sm:$0xff]
        %v1162 = vld [vmem:[%s7 + $0x58] sm:$0xff]
        %v1163 = vld [vmem:[%s7 + $0x60] sm:$0xff]
        %v1164 = vld [vmem:[%s7 + $0x68] sm:$0xff]
        %v1165 = vld [vmem:[%s7 + $0x70] sm:$0xff]
        %v1166 = vld [vmem:[%s7 + $0x78] sm:$0xff]
        %v1167 = vld [vmem:[#allocation10] sm:$0x3]
        %v1169 = vlaneseq
        %v1170 = vshrl.u32 %v1169, 7
        %v1171 = vsub.s32 0, %v1170
        %v1172 = vrot.slane %v1167, %v1171
        %v1173 = vlaneseq
        %v1174 = vshrl.u32 %v1173, 7
        %v1175 = vsub.s32 1, %v1174
        %v1176 = vrot.slane %v1167, %v1175
        %v1195 = vunpack.c.l.b16 %v1151
        %v1196 = vunpack.c.h.b16 %v1151
        %v1197 = vunpack.c.l.b16 %v1152
        %v1198 = vunpack.c.h.b16 %v1152
        %v1199 = vunpack.c.l.b16 %v1153
        %v1200 = vunpack.c.h.b16 %v1153
        %v1201 = vunpack.c.l.b16 %v1154
        %v1202 = vunpack.c.h.b16 %v1154
        %v1203 = vunpack.c.l.b16 %v1155
        %v1204 = vunpack.c.h.b16 %v1155
        %v1205 = vunpack.c.l.b16 %v1156
        %v1206 = vunpack.c.h.b16 %v1156
        %v1207 = vunpack.c.l.b16 %v1157
        %v1208 = vunpack.c.h.b16 %v1157
        %v1209 = vunpack.c.l.b16 %v1158
        %v1210 = vunpack.c.h.b16 %v1158
        %v1211 = vunpack.c.l.b16 %v1159
        %v1212 = vunpack.c.h.b16 %v1159
        %v1213 = vunpack.c.l.b16 %v1160
        %v1214 = vunpack.c.h.b16 %v1160
        %v1215 = vunpack.c.l.b16 %v1161
        %v1216 = vunpack.c.h.b16 %v1161
        %v1217 = vunpack.c.l.b16 %v1162
        %v1218 = vunpack.c.h.b16 %v1162
        %v1219 = vunpack.c.l.b16 %v1163
        %v1220 = vunpack.c.h.b16 %v1163
        %v1221 = vunpack.c.l.b16 %v1164
        %v1222 = vunpack.c.h.b16 %v1164
        %v1223 = vunpack.c.l.b16 %v1165
        %v1224 = vunpack.c.h.b16 %v1165
        %v1225 = vunpack.c.l.b16 %v1166
        %v1226 = vunpack.c.h.b16 %v1166
        %v1227 = vpack.c.b16 %v1197, %v1195
        %v1228 = vpack.c.b16 %v1198, %v1196
        %v1229 = vpack.c.b16 %v1201, %v1199
        %v1230 = vpack.c.b16 %v1202, %v1200
        %v1231 = vpack.c.b16 %v1205, %v1203
        %v1232 = vpack.c.b16 %v1206, %v1204
        %v1233 = vpack.c.b16 %v1209, %v1207
        %v1234 = vpack.c.b16 %v1210, %v1208
        %v1235 = vpack.c.b16 %v1213, %v1211
        %v1236 = vpack.c.b16 %v1214, %v1212
        %v1237 = vpack.c.b16 %v1217, %v1215
        %v1238 = vpack.c.b16 %v1218, %v1216
        %v1239 = vpack.c.b16 %v1221, %v1219
        %v1240 = vpack.c.b16 %v1222, %v1220
        %v1241 = vpack.c.b16 %v1225, %v1223
        %v1242 = vpack.c.b16 %v1226, %v1224
        %1259 = vmatprep.subr.bf16.mxu0 %v1228
        %1260 = vmatpush1.bf16.msra.mxu0 %v1227
        %1261 = vmatprep.subr.bf16.mxu0 %v1230
        %1262 = vmatpush1.bf16.msra.mxu0 %v1229
        %1263 = vmatprep.subr.bf16.mxu0 %v1232
        %1264 = vmatpush1.bf16.msra.mxu0 %v1231
        %1265 = vmatprep.subr.bf16.mxu0 %v1234
        %1266 = vmatpush1.bf16.msra.mxu0 %v1233
        %1267 = vmatprep.subr.bf16.mxu0 %v1236
        %1268 = vmatpush1.bf16.msra.mxu0 %v1235
        %1269 = vmatprep.subr.bf16.mxu0 %v1238
        %1270 = vmatpush1.bf16.msra.mxu0 %v1237
        %1271 = vmatprep.subr.bf16.mxu0 %v1240
        %1272 = vmatpush1.bf16.msra.mxu0 %v1239
        %1273 = vmatprep.subr.bf16.mxu0 %v1242
        %1274 = vmatpush1.bf16.msra.mxu0 %v1241
        %1275 = vmatprep.subr.bf16.mxu0 0
        %1276 = vmatpush1.bf16.msra.mxu0 0
        %1277 = vmatprep.subr.bf16.mxu0 0
        %1278 = vmatpush1.bf16.msra.mxu0 0
        %1279 = vmatprep.subr.bf16.mxu0 0
        %1280 = vmatpush1.bf16.msra.mxu0 0
        %1281 = vmatprep.subr.bf16.mxu0 0
        %1282 = vmatpush1.bf16.msra.mxu0 0
        %1283 = vmatprep.subr.bf16.mxu0 0
        %1284 = vmatpush1.bf16.msra.mxu0 0
        %1285 = vmatprep.subr.bf16.mxu0 0
        %1286 = vmatpush1.bf16.msra.mxu0 0
        %1287 = vmatprep.subr.bf16.mxu0 0
        %1288 = vmatpush1.bf16.msra.mxu0 0
        %1289 = vmatprep.subr.bf16.mxu0 0
        %1290 = vmatpush1.bf16.msra.mxu0 0
        %1291 = vmatprep.mubr.bf16.mxu0 0
        %1292 = vmatmul.mubr.bf16.gmra.mrb[0].mxu0 %v1143
        %v1293 = vpop.f32.mrb[0].mxu0
        %v1294 = vadd.f32 %v1172, %v1293
        %v1295 = vpop.f32.mrb[0].mxu0
        %v1296 = vadd.f32 %v1176, %v1295
        %v1297 = vpop.f32.mrb[0].mxu0
        %v1298 = vadd.f32 %v1172, %v1297
        %v1299 = vpop.f32.mrb[0].mxu0
        %v1300 = vadd.f32 %v1176, %v1299
        %1301 = vmatprep.mubr.bf16.mxu0 0
        %1302 = vmatmul.mubr.bf16.gmra.mrb[0].mxu0 %v1144
        %v1303 = vpop.f32.mrb[0].mxu0
        %v1304 = vadd.f32 %v1172, %v1303
        %v1305 = vpop.f32.mrb[0].mxu0
        %v1306 = vadd.f32 %v1176, %v1305
        %v1307 = vpop.f32.mrb[0].mxu0
        %v1308 = vadd.f32 %v1172, %v1307
        %v1309 = vpop.f32.mrb[0].mxu0
        %v1310 = vadd.f32 %v1176, %v1309
        %1311 = vmatprep.mubr.bf16.mxu0 0
        %1312 = vmatmul.mubr.bf16.gmra.mrb[0].mxu0 %v1145
        %v1313 = vpop.f32.mrb[0].mxu0
        %v1314 = vadd.f32 %v1172, %v1313
        %v1315 = vpop.f32.mrb[0].mxu0
        %v1316 = vadd.f32 %v1176, %v1315
        %v1317 = vpop.f32.mrb[0].mxu0
        %v1318 = vadd.f32 %v1172, %v1317
        %v1319 = vpop.f32.mrb[0].mxu0
        %v1320 = vadd.f32 %v1176, %v1319
        %1321 = vmatprep.mubr.bf16.mxu0 0
        %1322 = vmatmul.mubr.bf16.gmra.mrb[0].mxu0 %v1146
        %v1323 = vpop.f32.mrb[0].mxu0
        %v1324 = vadd.f32 %v1172, %v1323
        %v1325 = vpop.f32.mrb[0].mxu0
        %v1326 = vadd.f32 %v1176, %v1325
        %v1327 = vpop.f32.mrb[0].mxu0
        %v1328 = vadd.f32 %v1172, %v1327
        %v1329 = vpop.f32.mrb[0].mxu0
        %v1330 = vadd.f32 %v1176, %v1329
        %1331 = vmatprep.mubr.bf16.mxu0 0
        %1332 = vmatmul.mubr.bf16.gmra.mrb[0].mxu0 %v1147
        %v1333 = vpop.f32.mrb[0].mxu0
        %v1334 = vadd.f32 %v1172, %v1333
        %v1335 = vpop.f32.mrb[0].mxu0
        %v1336 = vadd.f32 %v1176, %v1335
        %v1337 = vpop.f32.mrb[0].mxu0
        %v1338 = vadd.f32 %v1172, %v1337
        %v1339 = vpop.f32.mrb[0].mxu0
        %v1340 = vadd.f32 %v1176, %v1339
        %1341 = vmatprep.mubr.bf16.mxu0 0
        %1342 = vmatmul.mubr.bf16.gmra.mrb[0].mxu0 %v1148
        %v1343 = vpop.f32.mrb[0].mxu0
        %v1344 = vadd.f32 %v1172, %v1343
        %v1345 = vpop.f32.mrb[0].mxu0
        %v1346 = vadd.f32 %v1176, %v1345
        %v1347 = vpop.f32.mrb[0].mxu0
        %v1348 = vadd.f32 %v1172, %v1347
        %v1349 = vpop.f32.mrb[0].mxu0
        %v1350 = vadd.f32 %v1176, %v1349
        %1351 = vmatprep.mubr.bf16.mxu0 0
        %1352 = vmatmul.mubr.bf16.gmra.mrb[0].mxu0 %v1149
        %v1353 = vpop.f32.mrb[0].mxu0
        %v1354 = vadd.f32 %v1172, %v1353
        %v1355 = vpop.f32.mrb[0].mxu0
        %v1356 = vadd.f32 %v1176, %v1355
        %v1357 = vpop.f32.mrb[0].mxu0
        %v1358 = vadd.f32 %v1172, %v1357
        %v1359 = vpop.f32.mrb[0].mxu0
        %v1360 = vadd.f32 %v1176, %v1359
        %1361 = vmatprep.mubr.bf16.mxu0 0
        %1362 = vmatmul.mubr.bf16.gmra.mrb[0].mxu0 %v1150
        %v1363 = vpop.f32.mrb[0].mxu0
        %v1364 = vadd.f32 %v1172, %v1363
        %v1365 = vpop.f32.mrb[0].mxu0
        %v1366 = vadd.f32 %v1176, %v1365
        %v1367 = vpop.f32.mrb[0].mxu0
        %v1368 = vadd.f32 %v1172, %v1367
        %v1369 = vpop.f32.mrb[0].mxu0
        %v1370 = vadd.f32 %v1176, %v1369
        %1371 = vdwg.mxu0
        %v1372 = vmax.f32 %v1294, 0.0
        %v1373 = vmax.f32 %v1298, 0.0
        %v1374 = vmax.f32 %v1304, 0.0
        %v1375 = vmax.f32 %v1308, 0.0
        %v1376 = vmax.f32 %v1314, 0.0
        %v1377 = vmax.f32 %v1318, 0.0
        %v1378 = vmax.f32 %v1324, 0.0
        %v1379 = vmax.f32 %v1328, 0.0
        %v1380 = vmax.f32 %v1334, 0.0
        %v1381 = vmax.f32 %v1338, 0.0
        %v1382 = vmax.f32 %v1344, 0.0
        %v1383 = vmax.f32 %v1348, 0.0
        %v1384 = vmax.f32 %v1354, 0.0
        %v1385 = vmax.f32 %v1358, 0.0
        %v1386 = vmax.f32 %v1364, 0.0
        %v1387 = vmax.f32 %v1368, 0.0
        %v1388 = vadd.f32 %v1372, %v1296
        %v1389 = vadd.f32 %v1373, %v1300
        %v1390 = vadd.f32 %v1374, %v1306
        %v1391 = vadd.f32 %v1375, %v1310
        %v1392 = vadd.f32 %v1376, %v1316
        %v1393 = vadd.f32 %v1377, %v1320
        %v1394 = vadd.f32 %v1378, %v1326
        %v1395 = vadd.f32 %v1379, %v1330
        %v1396 = vadd.f32 %v1380, %v1336
        %v1397 = vadd.f32 %v1381, %v1340
        %v1398 = vadd.f32 %v1382, %v1346
        %v1399 = vadd.f32 %v1383, %v1350
        %v1400 = vadd.f32 %v1384, %v1356
        %v1401 = vadd.f32 %v1385, %v1360
        %v1402 = vadd.f32 %v1386, %v1366
        %v1403 = vadd.f32 %v1387, %v1370
        %v1404 = vpack.c.bf16 %v1389, %v1388
        %v1405 = vpack.c.bf16 %v1391, %v1390
        %v1406 = vpack.c.bf16 %v1393, %v1392
        %v1407 = vpack.c.bf16 %v1395, %v1394
        %v1408 = vpack.c.bf16 %v1397, %v1396
        %v1409 = vpack.c.bf16 %v1399, %v1398
        %v1410 = vpack.c.bf16 %v1401, %v1400
        %v1411 = vpack.c.bf16 %v1403, %v1402
        %v1412 = vld [vmem:[%s9] sm:$0xf]
        %v1413 = vld [vmem:[%s9 + $0x4] sm:$0xf]
        %v1414 = vld [vmem:[%s9 + $0x8] sm:$0xf]
        %v1415 = vld [vmem:[%s9 + $0xc] sm:$0xf]
        %v1416 = vld [vmem:[%s9 + $0x10] sm:$0xf]
        %v1417 = vld [vmem:[%s9 + $0x14] sm:$0xf]
        %v1418 = vld [vmem:[%s9 + $0x18] sm:$0xf]
        %v1419 = vld [vmem:[%s9 + $0x1c] sm:$0xf]
        %v1420 = vld [vmem:[%s9 + $0x20] sm:$0xf]
        %v1421 = vld [vmem:[%s9 + $0x24] sm:$0xf]
        %v1422 = vld [vmem:[%s9 + $0x28] sm:$0xf]
        %v1423 = vld [vmem:[%s9 + $0x2c] sm:$0xf]
        %v1424 = vld [vmem:[%s9 + $0x30] sm:$0xf]
        %v1425 = vld [vmem:[%s9 + $0x34] sm:$0xf]
        %v1426 = vld [vmem:[%s9 + $0x38] sm:$0xf]
        %v1427 = vld [vmem:[%s9 + $0x3c] sm:$0xf]
        %v1428 = vld [vmem:[%s10] sm:$0x1]
        %v1430 = vlaneseq
        %v1431 = vshrl.u32 %v1430, 7
        %v1432 = vsub.s32 0, %v1431
        %v1433 = vrot.slane %v1428, %v1432
        %v1451 = vunpack.c.l.b16 %v1412
        %v1452 = vunpack.c.l.b16 %v1413
        %v1453 = vunpack.c.l.b16 %v1414
        %v1454 = vunpack.c.l.b16 %v1415
        %v1455 = vunpack.c.l.b16 %v1416
        %v1456 = vunpack.c.l.b16 %v1417
        %v1457 = vunpack.c.l.b16 %v1418
        %v1458 = vunpack.c.l.b16 %v1419
        %v1459 = vunpack.c.l.b16 %v1420
        %v1460 = vunpack.c.l.b16 %v1421
        %v1461 = vunpack.c.l.b16 %v1422
        %v1462 = vunpack.c.l.b16 %v1423
        %v1463 = vunpack.c.l.b16 %v1424
        %v1464 = vunpack.c.l.b16 %v1425
        %v1465 = vunpack.c.l.b16 %v1426
        %v1466 = vunpack.c.l.b16 %v1427
        %v1467 = vpack.c.b16 %v1452, %v1451
        %v1468 = vpack.c.b16 %v1454, %v1453
        %v1469 = vpack.c.b16 %v1456, %v1455
        %v1470 = vpack.c.b16 %v1458, %v1457
        %v1471 = vpack.c.b16 %v1460, %v1459
        %v1472 = vpack.c.b16 %v1462, %v1461
        %v1473 = vpack.c.b16 %v1464, %v1463
        %v1474 = vpack.c.b16 %v1466, %v1465
        %1483 = vmatprep.subr.bf16.mxu0 0
        %1484 = vmatpush1.bf16.msra.mxu0 %v1467
        %1485 = vmatprep.subr.bf16.mxu0 0
        %1486 = vmatpush1.bf16.msra.mxu0 %v1468
        %1487 = vmatprep.subr.bf16.mxu0 0
        %1488 = vmatpush1.bf16.msra.mxu0 %v1469
        %1489 = vmatprep.subr.bf16.mxu0 0
        %1490 = vmatpush1.bf16.msra.mxu0 %v1470
        %1491 = vmatprep.subr.bf16.mxu0 0
        %1492 = vmatpush1.bf16.msra.mxu0 %v1471
        %1493 = vmatprep.subr.bf16.mxu0 0
        %1494 = vmatpush1.bf16.msra.mxu0 %v1472
        %1495 = vmatprep.subr.bf16.mxu0 0
        %1496 = vmatpush1.bf16.msra.mxu0 %v1473
        %1497 = vmatprep.subr.bf16.mxu0 0
        %1498 = vmatpush1.bf16.msra.mxu0 %v1474
        %1499 = vmatprep.subr.bf16.mxu0 0
        %1500 = vmatpush1.bf16.msra.mxu0 0
        %1501 = vmatprep.subr.bf16.mxu0 0
        %1502 = vmatpush1.bf16.msra.mxu0 0
        %1503 = vmatprep.subr.bf16.mxu0 0
        %1504 = vmatpush1.bf16.msra.mxu0 0
        %1505 = vmatprep.subr.bf16.mxu0 0
        %1506 = vmatpush1.bf16.msra.mxu0 0
        %1507 = vmatprep.subr.bf16.mxu0 0
        %1508 = vmatpush1.bf16.msra.mxu0 0
        %1509 = vmatprep.subr.bf16.mxu0 0
        %1510 = vmatpush1.bf16.msra.mxu0 0
        %1511 = vmatprep.subr.bf16.mxu0 0
        %1512 = vmatpush1.bf16.msra.mxu0 0
        %1513 = vmatprep.subr.bf16.mxu0 0
        %1514 = vmatpush1.bf16.msra.mxu0 0
        %1515 = vmatprep.mubr.bf16.mxu0 0
        %1516 = vmatmul.mubr.bf16.gmra.mrb[0].mxu0 %v1404
        %v1517 = vpop.f32.mrb[0].mxu0
        %v1518 = vadd.f32 %v1433, %v1517
        %v1519 = vpop.f32.mrb[0].mxu0
        %v1520 = vpop.f32.mrb[0].mxu0
        %v1521 = vadd.f32 %v1433, %v1520
        %v1522 = vpop.f32.mrb[0].mxu0
        %1523 = vmatprep.mubr.bf16.mxu0 0
        %1524 = vmatmul.mubr.bf16.gmra.mrb[0].mxu0 %v1405
        %v1525 = vpop.f32.mrb[0].mxu0
        %v1526 = vadd.f32 %v1433, %v1525
        %v1527 = vpop.f32.mrb[0].mxu0
        %v1528 = vpop.f32.mrb[0].mxu0
        %v1529 = vadd.f32 %v1433, %v1528
        %v1530 = vpop.f32.mrb[0].mxu0
        %1531 = vmatprep.mubr.bf16.mxu0 0
        %1532 = vmatmul.mubr.bf16.gmra.mrb[0].mxu0 %v1406
        %v1533 = vpop.f32.mrb[0].mxu0
        %v1534 = vadd.f32 %v1433, %v1533
        %v1535 = vpop.f32.mrb[0].mxu0
        %v1536 = vpop.f32.mrb[0].mxu0
        %v1537 = vadd.f32 %v1433, %v1536
        %v1538 = vpop.f32.mrb[0].mxu0
        %1539 = vmatprep.mubr.bf16.mxu0 0
        %1540 = vmatmul.mubr.bf16.gmra.mrb[0].mxu0 %v1407
        %v1541 = vpop.f32.mrb[0].mxu0
        %v1542 = vadd.f32 %v1433, %v1541
        %v1543 = vpop.f32.mrb[0].mxu0
        %v1544 = vpop.f32.mrb[0].mxu0
        %v1545 = vadd.f32 %v1433, %v1544
        %v1546 = vpop.f32.mrb[0].mxu0
        %1547 = vmatprep.mubr.bf16.mxu0 0
        %1548 = vmatmul.mubr.bf16.gmra.mrb[0].mxu0 %v1408
        %v1549 = vpop.f32.mrb[0].mxu0
        %v1550 = vadd.f32 %v1433, %v1549
        %v1551 = vpop.f32.mrb[0].mxu0
        %v1552 = vpop.f32.mrb[0].mxu0
        %v1553 = vadd.f32 %v1433, %v1552
        %v1554 = vpop.f32.mrb[0].mxu0
        %1555 = vmatprep.mubr.bf16.mxu0 0
        %1556 = vmatmul.mubr.bf16.gmra.mrb[0].mxu0 %v1409
        %v1557 = vpop.f32.mrb[0].mxu0
        %v1558 = vadd.f32 %v1433, %v1557
        %v1559 = vpop.f32.mrb[0].mxu0
        %v1560 = vpop.f32.mrb[0].mxu0
        %v1561 = vadd.f32 %v1433, %v1560
        %v1562 = vpop.f32.mrb[0].mxu0
        %1563 = vmatprep.mubr.bf16.mxu0 0
        %1564 = vmatmul.mubr.bf16.gmra.mrb[0].mxu0 %v1410
        %v1565 = vpop.f32.mrb[0].mxu0
        %v1566 = vadd.f32 %v1433, %v1565
        %v1567 = vpop.f32.mrb[0].mxu0
        %v1568 = vpop.f32.mrb[0].mxu0
        %v1569 = vadd.f32 %v1433, %v1568
        %v1570 = vpop.f32.mrb[0].mxu0
        %1571 = vmatprep.mubr.bf16.mxu0 0
        %1572 = vmatmul.mubr.bf16.gmra.mrb[0].mxu0 %v1411
        %v1573 = vpop.f32.mrb[0].mxu0
        %v1574 = vadd.f32 %v1433, %v1573
        %v1575 = vpop.f32.mrb[0].mxu0
        %v1576 = vpop.f32.mrb[0].mxu0
        %v1577 = vadd.f32 %v1433, %v1576
        %v1578 = vpop.f32.mrb[0].mxu0
        %1579 = vdwg.mxu0
        %1580 = vmax.xlane.f32.xlu0 %v1518
        %v1581 = vpop.xlane.xlu0 %1580
        %1582 = vmax.xlane.f32.xlu0 %v1521
        %v1583 = vpop.xlane.xlu0 %1582
        %1584 = vmax.xlane.f32.xlu0 %v1526
        %v1585 = vpop.xlane.xlu0 %1584
        %1586 = vmax.xlane.f32.xlu0 %v1529
        %v1587 = vpop.xlane.xlu0 %1586
        %1588 = vmax.xlane.f32.xlu0 %v1534
        %v1589 = vpop.xlane.xlu0 %1588
        %1590 = vmax.xlane.f32.xlu0 %v1537
        %v1591 = vpop.xlane.xlu0 %1590
        %1592 = vmax.xlane.f32.xlu0 %v1542
        %v1593 = vpop.xlane.xlu0 %1592
        %1594 = vmax.xlane.f32.xlu0 %v1545
        %v1595 = vpop.xlane.xlu0 %1594
        %1596 = vmax.xlane.f32.xlu0 %v1550
        %v1597 = vpop.xlane.xlu0 %1596
        %1598 = vmax.xlane.f32.xlu0 %v1553
        %v1599 = vpop.xlane.xlu0 %1598
        %1600 = vmax.xlane.f32.xlu0 %v1558
        %v1601 = vpop.xlane.xlu0 %1600
        %1602 = vmax.xlane.f32.xlu0 %v1561
        %v1603 = vpop.xlane.xlu0 %1602
        %1604 = vmax.xlane.f32.xlu0 %v1566
        %v1605 = vpop.xlane.xlu0 %1604
        %1606 = vmax.xlane.f32.xlu0 %v1569
        %v1607 = vpop.xlane.xlu0 %1606
        %1608 = vmax.xlane.f32.xlu0 %v1574
        %v1609 = vpop.xlane.xlu0 %1608
        %1610 = vmax.xlane.f32.xlu0 %v1577
        %v1611 = vpop.xlane.xlu0 %1610
        %v1612 = vsub.f32 %v1518, %v1581
        %v1613 = vsub.f32 %v1521, %v1583
        %v1614 = vsub.f32 %v1526, %v1585
        %v1615 = vsub.f32 %v1529, %v1587
        %v1616 = vsub.f32 %v1534, %v1589
        %v1617 = vsub.f32 %v1537, %v1591
        %v1618 = vsub.f32 %v1542, %v1593
        %v1619 = vsub.f32 %v1545, %v1595
        %v1620 = vsub.f32 %v1550, %v1597
        %v1621 = vsub.f32 %v1553, %v1599
        %v1622 = vsub.f32 %v1558, %v1601
        %v1623 = vsub.f32 %v1561, %v1603
        %v1624 = vsub.f32 %v1566, %v1605
        %v1625 = vsub.f32 %v1569, %v1607
        %v1626 = vsub.f32 %v1574, %v1609
        %v1627 = vsub.f32 %v1577, %v1611
        %v1628 = vmul.f32 %v1612, 1.442695
        %v1629 = vpow.pop %v1628
        %v1630 = vmul.f32 %v1613, 1.442695
        %v1631 = vpow.pop %v1630
        %v1632 = vmul.f32 %v1614, 1.442695
        %v1633 = vpow.pop %v1632
        %v1634 = vmul.f32 %v1615, 1.442695
        %v1635 = vpow.pop %v1634
        %v1636 = vmul.f32 %v1616, 1.442695
        %v1637 = vpow.pop %v1636
        %v1638 = vmul.f32 %v1617, 1.442695
        %v1639 = vpow.pop %v1638
        %v1640 = vmul.f32 %v1618, 1.442695
        %v1641 = vpow.pop %v1640
        %v1642 = vmul.f32 %v1619, 1.442695
        %v1643 = vpow.pop %v1642
        %v1644 = vmul.f32 %v1620, 1.442695
        %v1645 = vpow.pop %v1644
        %v1646 = vmul.f32 %v1621, 1.442695
        %v1647 = vpow.pop %v1646
        %v1648 = vmul.f32 %v1622, 1.442695
        %v1649 = vpow.pop %v1648
        %v1650 = vmul.f32 %v1623, 1.442695
        %v1651 = vpow.pop %v1650
        %v1652 = vmul.f32 %v1624, 1.442695
        %v1653 = vpow.pop %v1652
        %v1654 = vmul.f32 %v1625, 1.442695
        %v1655 = vpow.pop %v1654
        %v1656 = vmul.f32 %v1626, 1.442695
        %v1657 = vpow.pop %v1656
        %v1658 = vmul.f32 %v1627, 1.442695
        %v1659 = vpow.pop %v1658
        %1660 = vadd.xlane.f32.xlu0 %v1629
        %v1661 = vpop.xlane.xlu0 %1660
        %1662 = vadd.xlane.f32.xlu0 %v1631
        %v1663 = vpop.xlane.xlu0 %1662
        %1664 = vadd.xlane.f32.xlu0 %v1633
        %v1665 = vpop.xlane.xlu0 %1664
        %1666 = vadd.xlane.f32.xlu0 %v1635
        %v1667 = vpop.xlane.xlu0 %1666
        %1668 = vadd.xlane.f32.xlu0 %v1637
        %v1669 = vpop.xlane.xlu0 %1668
        %1670 = vadd.xlane.f32.xlu0 %v1639
        %v1671 = vpop.xlane.xlu0 %1670
        %1672 = vadd.xlane.f32.xlu0 %v1641
        %v1673 = vpop.xlane.xlu0 %1672
        %1674 = vadd.xlane.f32.xlu0 %v1643
        %v1675 = vpop.xlane.xlu0 %1674
        %1676 = vadd.xlane.f32.xlu0 %v1645
        %v1677 = vpop.xlane.xlu0 %1676
        %1678 = vadd.xlane.f32.xlu0 %v1647
        %v1679 = vpop.xlane.xlu0 %1678
        %1680 = vadd.xlane.f32.xlu0 %v1649
        %v1681 = vpop.xlane.xlu0 %1680
        %1682 = vadd.xlane.f32.xlu0 %v1651
        %v1683 = vpop.xlane.xlu0 %1682
        %1684 = vadd.xlane.f32.xlu0 %v1653
        %v1685 = vpop.xlane.xlu0 %1684
        %1686 = vadd.xlane.f32.xlu0 %v1655
        %v1687 = vpop.xlane.xlu0 %1686
        %1688 = vadd.xlane.f32.xlu0 %v1657
        %v1689 = vpop.xlane.xlu0 %1688
        %1690 = vadd.xlane.f32.xlu0 %v1659
        %v1691 = vpop.xlane.xlu0 %1690
        %v1692 = vrcp.pop %v1661
        %v1693 = vrcp.pop %v1663
        %v1694 = vrcp.pop %v1665
        %v1695 = vrcp.pop %v1667
        %v1696 = vrcp.pop %v1669
        %v1697 = vrcp.pop %v1671
        %v1698 = vrcp.pop %v1673
        %v1699 = vrcp.pop %v1675
        %v1700 = vrcp.pop %v1677
        %v1701 = vrcp.pop %v1679
        %v1702 = vrcp.pop %v1681
        %v1703 = vrcp.pop %v1683
        %v1704 = vrcp.pop %v1685
        %v1705 = vrcp.pop %v1687
        %v1706 = vrcp.pop %v1689
        %v1707 = vrcp.pop %v1691
        %v1708 = vmul.f32 %v1629, %v1692
        %v1709 = vmul.f32 %v1631, %v1693
        %v1710 = vmul.f32 %v1633, %v1694
        %v1711 = vmul.f32 %v1635, %v1695
        %v1712 = vmul.f32 %v1637, %v1696
        %v1713 = vmul.f32 %v1639, %v1697
        %v1714 = vmul.f32 %v1641, %v1698
        %v1715 = vmul.f32 %v1643, %v1699
        %v1716 = vmul.f32 %v1645, %v1700
        %v1717 = vmul.f32 %v1647, %v1701
        %v1718 = vmul.f32 %v1649, %v1702
        %v1719 = vmul.f32 %v1651, %v1703
        %v1720 = vmul.f32 %v1653, %v1704
        %v1721 = vmul.f32 %v1655, %v1705
        %v1722 = vmul.f32 %v1657, %v1706
        %v1723 = vmul.f32 %v1659, %v1707
        %v1724 = vpack.c.bf16 %v1709, %v1708
        %v1725 = vpack.c.bf16 %v1711, %v1710
        %v1726 = vpack.c.bf16 %v1713, %v1712
        %v1727 = vpack.c.bf16 %v1715, %v1714
        %v1728 = vpack.c.bf16 %v1717, %v1716
        %v1729 = vpack.c.bf16 %v1719, %v1718
        %v1730 = vpack.c.bf16 %v1721, %v1720
        %v1731 = vpack.c.bf16 %v1723, %v1722
        %v1740 = vunpack.c.l.b16 %v1724
        %v1741 = vunpack.c.h.b16 %v1724
        %v1742 = vunpack.c.l.b16 %v1725
        %v1743 = vunpack.c.h.b16 %v1725
        %v1744 = vunpack.c.l.b16 %v1726
        %v1745 = vunpack.c.h.b16 %v1726
        %v1746 = vunpack.c.l.b16 %v1727
        %v1747 = vunpack.c.h.b16 %v1727
        %v1748 = vunpack.c.l.b16 %v1728
        %v1749 = vunpack.c.h.b16 %v1728
        %v1750 = vunpack.c.l.b16 %v1729
        %v1751 = vunpack.c.h.b16 %v1729
        %v1752 = vunpack.c.l.b16 %v1730
        %v1753 = vunpack.c.h.b16 %v1730
        %v1754 = vunpack.c.l.b16 %v1731
        %v1755 = vunpack.c.h.b16 %v1731
        %v1756 = vpack.c.b16 %v1740, %v1740
        %v1757 = vpack.c.b16 %v1741, %v1741
        %v1758 = vpack.c.b16 %v1742, %v1742
        %v1759 = vpack.c.b16 %v1743, %v1743
        %v1760 = vpack.c.b16 %v1744, %v1744
        %v1761 = vpack.c.b16 %v1745, %v1745
        %v1762 = vpack.c.b16 %v1746, %v1746
        %v1763 = vpack.c.b16 %v1747, %v1747
        %v1764 = vpack.c.b16 %v1748, %v1748
        %v1765 = vpack.c.b16 %v1749, %v1749
        %v1766 = vpack.c.b16 %v1750, %v1750
        %v1767 = vpack.c.b16 %v1751, %v1751
        %v1768 = vpack.c.b16 %v1752, %v1752
        %v1769 = vpack.c.b16 %v1753, %v1753
        %v1770 = vpack.c.b16 %v1754, %v1754
        %v1771 = vpack.c.b16 %v1755, %v1755
        %1788 = vst [vmem:[%s447] sm:$0xf] %v1756
        %1789 = vst [vmem:[%s447 + $0x4] sm:$0xf] %v1757
        %1790 = vst [vmem:[%s447 + $0x8] sm:$0xf] %v1758
        %1791 = vst [vmem:[%s447 + $0xc] sm:$0xf] %v1759
        %1792 = vst [vmem:[%s447 + $0x10] sm:$0xf] %v1760
        %1793 = vst [vmem:[%s447 + $0x14] sm:$0xf] %v1761
        %1794 = vst [vmem:[%s447 + $0x18] sm:$0xf] %v1762
        %1795 = vst [vmem:[%s447 + $0x1c] sm:$0xf] %v1763
        %1796 = vst [vmem:[%s447 + $0x20] sm:$0xf] %v1764
        %1797 = vst [vmem:[%s447 + $0x24] sm:$0xf] %v1765
        %1798 = vst [vmem:[%s447 + $0x28] sm:$0xf] %v1766
        %1799 = vst [vmem:[%s447 + $0x2c] sm:$0xf] %v1767
        %1800 = vst [vmem:[%s447 + $0x30] sm:$0xf] %v1768
        %1801 = vst [vmem:[%s447 + $0x34] sm:$0xf] %v1769
        %1802 = vst [vmem:[%s447 + $0x38] sm:$0xf] %v1770
        %1803 = vst [vmem:[%s447 + $0x3c] sm:$0xf] %v1771
        %s1804 = sand.u32 %s272, 1
        %s1805 = scalar_lea.sflag [#allocation4], %s1804
        %s1806 = sand.u32 %s272, 1
        %s1807 = smul.addr %s1806, 64
        %s1808 = scalar_lea.vmem [#allocation11], %s1807
        // Predicated region
        $region85: #{tpu_custom_call.1} parent=63 // pred_check
          %p1809 = pneg %p282
        $region86: #{tpu_custom_call.1} parent=63 // pred_check_branch
          %1811 = sbr.rel (%p1809) target = $region88
        $region87: #{tpu_custom_call.1} parent=63 // pred_region
          %s1812 = smul.u32 16, %s28
          %s1814 = ssub.s32 1024, 1024
          %1815 = vsyncadd %s1805, %s1814
          %s1816 = smul.addr %s1812, 64
          %s1817 = scalar_lea.hbm %s11, %s1816
          %s1818 = sshll.u32 %s1808, 4
          %s1819 = int_to_ptr.vmem [resolvable:$true] %s1818
          %1824 = dma.vmem_to_hbm [thread:$0]  %s1819, 1024, %s1817, %s1805, 64, 64, 4
        $region88: #{tpu_custom_call.1} parent=63 // pred_fallthru
          _
      $region64: #{tpu_custom_call.1} parent=5 // pred_fallthru
        _
      %p1825 = scmp.le.s32.totalorder 2, %s23
      // Predicated region
      $region89: #{tpu_custom_call.1} parent=5 // pred_check
        %p1826 = pneg %p1825
      $region90: #{tpu_custom_call.1} parent=5 // pred_check_branch
        %1828 = sbr.rel (%p1826) target = $region92
      $region91: #{tpu_custom_call.1} parent=5 // pred_region
        %s1829 = ssub.s32 %s23, 2
        // Predicated region
        $region93: #{tpu_custom_call.1} parent=91 // pred_check
          %p1830 = pneg %p288
        $region94: #{tpu_custom_call.1} parent=91 // pred_check_branch
          %1832 = sbr.rel (%p1830) target = $region96
        $region95: #{tpu_custom_call.1} parent=91 // pred_region
          %s1833 = sand.u32 %s273, 1
          %s1834 = scalar_lea.sflag [#allocation4], %s1833
          %s1835 = sand.u32 %s273, 1
          %s1836 = smul.addr %s1835, 64
          %s1837 = scalar_lea.vmem [#allocation11], %s1836
          %1838 = dma.done %s1834, 1024
        $region96: #{tpu_custom_call.1} parent=91 // pred_fallthru
          _
      $region92: #{tpu_custom_call.1} parent=5 // pred_fallthru
        _
    $region6: #{tpu_custom_call.1} parent=1 // loop_footer
      %s27 = sadd.s32 1, %s23
    $region7: #{tpu_custom_call.1} parent=1 // loop_footer_branch
      %22 = sbr.rel target = $region3
    $region8: #{tpu_custom_call.1} parent=1 // loop_exit
      _
    %1839 = vsyncpa [#allocation3], 1
    %s1840 = scalar_lea.sflag [#allocation3], 1
    %1841 = vsyncpa %s1840, 1
    %1842 = vsyncpa [#allocation6], 1
    %1843 = vsyncpa [#allocation9], 1
    %1844 = vsyncpa [#allocation4], 1
    %s1845 = scalar_lea.sflag [#allocation4], 1
    %1846 = vsyncpa %s1845, 1

</llo_original>
